<compile_context>
chip_gen: v6e
topology: v6e:2x2x1
jax: 0.10.0
libtpu: 0.0.40
codegen_flags: <defaults>
</compile_context>

<pallas_src>
import jax
import jax.numpy as jnp
from jax.experimental import pallas as pl
from jax.experimental.pallas import tpu as pltpu

NEG_PAD_BIAS = -1e30   # pad-class bias -> exp() underflows to exactly 0 in the softmax
NEG_MASK = -1e9        # finite "minus infinity" for masked arc columns

_VMEM_LIMIT = 48 * (1 << 20)   # explicit scoped-VMEM limit (safe on v5e/v6e/v7x)
_VMEM_BUDGET = 40 * (1 << 20)  # working budget used for tile sizing (headroom below limit)

TAG_TASKS = ('lemmas', 'upos', 'feats')
GOLD_KEYS = {'lemmas': 'lemma_id', 'upos': 'pos_id', 'feats': 'feat_id'}


# ----------------------------------------------------------------------------
# Pallas kernels
# ----------------------------------------------------------------------------
def tag_kernel(mixw_ref, hidden_ref, w_ref, b_ref, logp_ref, z_ref, mixed_ref):
    """Fused scalar-mix + linear head + log-softmax for all tag tasks, plus the deps mix.

    mixw_ref:   SMEM [n_tag + 1, L]    gamma * softmax(w) per task (last row = deps)
    hidden_ref: VMEM [L, rows, H]      bf16 tile of the flattened hidden
    w_ref:      VMEM [n_tag, H, CP]    per-task weights, class dim zero-padded to CP
    b_ref:      VMEM [n_tag, 1, CP]    per-task biases, pad columns = -1e30
    logp_ref:   VMEM [n_tag, rows, CP] log-probabilities (softmax over real classes)
    z_ref:      VMEM [n_tag, rows, 1]  per-row logsumexp; logits = logp + z outside
    mixed_ref:  VMEM [rows, H]         deps scalar-mixed hidden (f32)
    """
    L = hidden_ref.shape[0]
    n_tag = w_ref.shape[0]

    def mix(task_idx):
        # per-task order: only ONE [rows, H] f32 accumulator live at a time
        acc = mixw_ref[task_idx, 0] * hidden_ref[0].astype(jnp.float32)
        for layer in range(1, L):
            acc = acc + mixw_ref[task_idx, layer] * hidden_ref[layer].astype(jnp.float32)
        return acc

    for t in range(n_tag):
        mixed = mix(t)
        logits = jnp.dot(mixed, w_ref[t],
                         preferred_element_type=jnp.float32) + b_ref[t]
        m = jnp.max(logits, axis=-1, keepdims=True)
        shifted = logits - m
        lse = jnp.log(jnp.sum(jnp.exp(shifted), axis=-1, keepdims=True))
        logp_ref[t] = shifted - lse
        z_ref[t] = m + lse

    mixed_ref[...] = mix(n_tag)   # deps scalar mix, shares this tile's hidden load


def deps_kernel(hidden_ref, mask_ref, arcs_ref,
                w_mlp_ref, b_mlp_ref,
                warc_main_ref, warc_bias_ref,
                wrel_flat_ref, brel_flat_ref,
                s_arc_ref, s_rel_ref, rel_gold_ref,
                mlp_scratch):
    """Biaffine dependency head; grid = (batch, T//tT), T axis 'arbitrary'.

    hidden_ref:    VMEM [1, T, H]    pre-mixed hidden (from the tag kernel)
    mask_ref:      VMEM [1, 1, T]    1.0 valid / 0.0 pad (head/key dimension)
    arcs_ref:      VMEM [1, tT, 1]   gold head indices (int32) for this query tile
    w_mlp_ref:     VMEM [H, P]       [w_arc_d | w_arc_h | w_rel_d | w_rel_h | ones-col | pad]
    b_mlp_ref:     VMEM [1, P]
    warc_main_ref: VMEM [A, A]       arc biaffine weight (bias_x row split off)
    warc_bias_ref: VMEM [1, A]
    wrel_flat_ref: VMEM [Rm, R*(Rm+1)]  rel biaffine, labels flattened into the lane dim
    brel_flat_ref: VMEM [1, R*(Rm+1)]
    outputs:       s_arc [1,tT,T] f32, s_rel [1,tT,R,T] bf16, rel_gold [1,tT,R] f32
    scratch:       mlp_scratch VMEM [T, P] f32 (full-T MLP, computed once per batch elem)
    """
    T = mask_ref.shape[2]
    A = warc_main_ref.shape[0]
    Rm = wrel_flat_ref.shape[0]
    R = s_rel_ref.shape[2]
    Rm1 = Rm + 1
    tT = s_arc_ref.shape[1]
    t_idx = pl.program_id(1)

    @pl.when(t_idx == 0)
    def _():
        # fused MLP for the FULL sequence: one lane-dense matmul + LeakyReLU(0.1)
        # (elit/supar MLP uses negative_slope=0.1; the extra "ones" column passes through)
        mlp = jnp.dot(hidden_ref[0], w_mlp_ref[...],
                      preferred_element_type=jnp.float32) + b_mlp_ref[...]
        mlp_scratch[...] = jnp.where(mlp > 0, mlp, 0.1 * mlp)

    if tT == T:
        rows_q = mlp_scratch[...]
    else:
        q0 = pl.multiple_of(t_idx * tT, 8)
        rows_q = mlp_scratch[pl.ds(q0, tT), :]

    arc_d_q = rows_q[:, :A]                                   # [tT, A]
    rel_d_q = rows_q[:, 2 * A:2 * A + Rm]                     # [tT, Rm]
    arc_h = mlp_scratch[:, A:2 * A]                           # [T, A]
    rel_h1 = mlp_scratch[:, 2 * A + Rm:2 * A + Rm + Rm1]      # [T, Rm+1] (ones col appended)

    # ---- arc biaffine (bias_x=True, bias_y=False) ----
    proj = jnp.dot(arc_d_q, warc_main_ref[...],
                   preferred_element_type=jnp.float32) + warc_bias_ref[...]      # [tT, A]
    s_arc = jax.lax.dot_general(proj, arc_h, (((1,), (1,)), ((), ())),
                                preferred_element_type=jnp.float32)              # [tT, T]
    s_arc = jnp.where(mask_ref[0] > 0, s_arc, jnp.float32(NEG_MASK))
    s_arc_ref[0] = s_arc

    # ---- rel biaffine (bias_x=True, bias_y=True) ----
    # first contraction over ALL labels in one lane-dense matmul (no broadcast_to)
    left = jnp.dot(rel_d_q, wrel_flat_ref[...],
                   preferred_element_type=jnp.float32) + brel_flat_ref[...]      # [tT, R*(Rm+1)]

    # gold-head key features (f32), gathered via a one-hot matmul
    arcs_q = arcs_ref[0]                                                         # [tT, 1] int32
    onehot = (jax.lax.broadcasted_iota(jnp.int32, (tT, T), 1) == arcs_q
              ).astype(jnp.float32)                                              # [tT, T]
    rel_h1_gold = jnp.dot(onehot, rel_h1, preferred_element_type=jnp.float32)    # [tT, Rm+1]

    gold_cols = []
    for r in range(R):
        left_r = left[:, r * Rm1:(r + 1) * Rm1]                                  # [tT, Rm+1]
        s_r = jax.lax.dot_general(left_r, rel_h1, (((1,), (1,)), ((), ())),
                                  preferred_element_type=jnp.float32)            # [tT, T]
        s_rel_ref[0, :, r, :] = s_r.astype(s_rel_ref.dtype)                      # bf16 store
        gold_cols.append(jnp.sum(left_r * rel_h1_gold, axis=-1, keepdims=True))  # [tT, 1] f32
    rel_gold_ref[0] = jnp.concatenate(gold_cols, axis=1)                         # [tT, R] f32


# ----------------------------------------------------------------------------
# Tile-size selection (VMEM-budget driven)
# ----------------------------------------------------------------------------
def _choose_rows(N, per_row_bytes, resident_bytes, *, budget=_VMEM_BUDGET,
                 min_tiles=4, step=16, max_rows=2048):
    fit = max(step, min(int((budget - resident_bytes) // max(per_row_bytes, 1)), max_rows))
    target = max(step, min(fit, -(-N // min_tiles)))
    target = max(step, (target // step) * step)
    best = None
    for r in range(step, min(target, N) + 1, step):
        if N % r == 0:
            best = r
    if best is not None:
        return best, N
    rows = target
    return rows, -(-N // rows) * rows


def _choose_t_tile(T, R, H, P, A, Rm1, *, budget=_VMEM_BUDGET, step=8):
    Rm = Rm1 - 1
    resident = (T * P * 4 + 2 * T * H * 4 + H * P * 4 + P * 4
                + A * A * 4 + A * 4
                + Rm * R * Rm1 * 4 + R * Rm1 * 4
                + 2 * T * 4 + (1 << 12))
    per_row = (2 * (R * T * 2 + T * 4 + R * 4 + 4)   # double-buffered output blocks + arcs
               + R * T * 4                           # f32 s_rel rows before the bf16 cast
               + 2 * R * Rm1 * 4 + P * 4 + T * 4 + Rm1 * 4)
    cands = [t for t in range(step, T, step) if T % t == 0] + [T]
    fitting = [t for t in cands if resident + t * per_row <= budget]
    return fitting[-1] if fitting else cands[0]


# ----------------------------------------------------------------------------
# pallas_call wrappers
# ----------------------------------------------------------------------------
def tag_decoder_pallas(hidden_flat, mixw, w_all, b_all):
    # hidden_flat [L, N, H] bf16, mixw [n_tag+1, L], w_all [n_tag, H, CP], b_all [n_tag, 1, CP]
    L, N, H = hidden_flat.shape
    n_tag, _, CP = w_all.shape
    per_row = (2 * L * H * 2                                   # bf16 hidden, double-buffered
               + 2 * (n_tag * CP * 4 + n_tag * 4 + H * 4)      # logp / z / mixed out, dbuf
               + 2 * H * 4 + 2 * CP * 4)                       # live f32 temporaries
    resident = n_tag * H * CP * 4 + n_tag * CP * 4 + (1 << 12)
    rows, Np = _choose_rows(N, per_row, resident)
    if Np != N:
        hidden_flat = jnp.pad(hidden_flat, ((0, 0), (0, Np - N), (0, 0)))

    vmem = pl.BlockSpec(memory_space=pltpu.MemorySpace.VMEM)
    smem = pl.BlockSpec(memory_space=pltpu.MemorySpace.SMEM)
    logp, z, mixed = pl.pallas_call(
        tag_kernel,
        grid=(Np // rows,),
        out_shape=(jax.ShapeDtypeStruct((n_tag, Np, CP), jnp.float32),
                   jax.ShapeDtypeStruct((n_tag, Np, 1), jnp.float32),
                   jax.ShapeDtypeStruct((Np, H), jnp.float32)),
        in_specs=[smem,
                  pl.BlockSpec((L, rows, H), lambda i: (0, i, 0)),
                  vmem, vmem],
        out_specs=(pl.BlockSpec((n_tag, rows, CP), lambda i: (0, i, 0)),
                   pl.BlockSpec((n_tag, rows, 1), lambda i: (0, i, 0)),
                   pl.BlockSpec((rows, H), lambda i: (i, 0))),
        compiler_params=pltpu.CompilerParams(
            dimension_semantics=("parallel",),
            vmem_limit_bytes=_VMEM_LIMIT),
    )(mixw, hidden_flat, w_all, b_all)
    return logp, z, mixed


def biaffine_pallas(mixed_bth, mask3, arcs, dp):
    # mixed_bth [B, T, H] f32 (pre-mixed), mask3 [B, 1, T] f32, arcs [B, T] int32
    B, T, H = mixed_bth.shape
    A = dp['warc_main'].shape[0]
    Rm = dp['wrel_flat'].shape[0]
    Rm1 = Rm + 1
    R = dp['wrel_flat'].shape[1] // Rm1
    P = dp['w_mlp'].shape[1]
    tT = _choose_t_tile(T, R, H, P, A, Rm1)
    nT = T // tT
    arcs3 = arcs.reshape(B, T, 1).astype(jnp.int32)

    vmem = pl.BlockSpec(memory_space=pltpu.MemorySpace.VMEM)
    s_arc, s_rel_raw, rel_gold = pl.pallas_call(
        deps_kernel,
        grid=(B, nT),
        out_shape=(jax.ShapeDtypeStruct((B, T, T), jnp.float32),
                   jax.ShapeDtypeStruct((B, T, R, T), jnp.bfloat16),
                   jax.ShapeDtypeStruct((B, T, R), jnp.float32)),
        in_specs=[
            pl.BlockSpec((1, T, H), lambda b, t: (b, 0, 0)),     # pre-mixed hidden slab
            pl.BlockSpec((1, 1, T), lambda b, t: (b, 0, 0)),     # key mask
            pl.BlockSpec((1, tT, 1), lambda b, t: (b, t, 0)),    # gold heads (query tile)
            vmem, vmem,                                          # fused MLP weight/bias
            vmem, vmem,                                          # arc biaffine
            vmem, vmem,                                          # rel biaffine (flattened)
        ],
        out_specs=(pl.BlockSpec((1, tT, T), lambda b, t: (b, t, 0)),
                   pl.BlockSpec((1, tT, R, T), lambda b, t: (b, t, 0, 0)),
                   pl.BlockSpec((1, tT, R), lambda b, t: (b, t, 0))),
        scratch_shapes=[pltpu.VMEM((T, P), jnp.float32)],
        compiler_params=pltpu.CompilerParams(
            dimension_semantics=("parallel", "arbitrary"),
            vmem_limit_bytes=_VMEM_LIMIT),
    )(mixed_bth, mask3, arcs3,
      dp['w_mlp'], dp['b_mlp'],
      dp['warc_main'], dp['warc_bias'],
      dp['wrel_flat'], dp['brel_flat'])
    return s_arc, s_rel_raw, rel_gold


# ----------------------------------------------------------------------------
# Parameter prep (hoisted: run ONCE, not per forward)
# ----------------------------------------------------------------------------
def _pad_cols(x, target, value=0.0):
    pad = target - x.shape[-1]
    if pad <= 0:
        return x
    return jnp.pad(x, [(0, 0)] * (x.ndim - 1) + [(0, pad)], constant_values=value)


def prepare_tag_params(params, tasks):
    cs = [params[t]['W'].shape[1] for t in tasks]
    CP = 128 * (-(-max(cs) // 128))
    w_all = jnp.stack([_pad_cols(params[t]['W'], CP) for t in tasks])
    b_all = jnp.stack([_pad_cols(params[t]['b'], CP, value=NEG_PAD_BIAS) for t in tasks])
    return {'w_all': w_all, 'b_all': b_all, 'class_counts': cs}


def prepare_deps_params(p):
    A = p['w_arc_d'].shape[1]
    Rm = p['w_rel_d'].shape[1]
    H = p['w_arc_d'].shape[0]
    R = p['w_rel_attn'].shape[0]
    Rm1 = Rm + 1
    # fused MLP + an extra "ones" column (weights 0, bias 1) so the bias_y term of the
    # rel biaffine needs no in-kernel concat (LeakyReLU(1) == 1)
    w_cat = jnp.concatenate([p['w_arc_d'], p['w_arc_h'], p['w_rel_d'], p['w_rel_h'],
                             jnp.zeros((H, 1), jnp.float32)], axis=1)
    b_cat = jnp.concatenate([p['b_arc_d'], p['b_arc_h'], p['b_rel_d'], p['b_rel_h'],
                             jnp.ones((1, 1), jnp.float32)], axis=1)
    P = 128 * (-(-w_cat.shape[1] // 128))
    wrel_main = p['w_rel_attn'][:, :Rm, :]                     # [R, Rm, Rm+1]
    wrel_bias = p['w_rel_attn'][:, Rm, :]                      # [R, Rm+1]   (bias_x row)
    return {
        'w_mlp': _pad_cols(w_cat, P),
        'b_mlp': _pad_cols(b_cat, P),
        'warc_main': p['w_arc_attn'][:A],
        'warc_bias': p['w_arc_attn'][A:A + 1],
        'wrel_flat': jnp.transpose(wrel_main, (1, 0, 2)).reshape(Rm, R * Rm1),
        'brel_flat': wrel_bias.reshape(1, R * Rm1),
    }


def prepare_all(params):
    return {'tag': prepare_tag_params(params, TAG_TASKS),
            'deps': prepare_deps_params(params['deps'])}


# ----------------------------------------------------------------------------
# Loss glue (cheap, plain JAX)
# ----------------------------------------------------------------------------
def smoothed_sequence_ce(logp, gold, mask, eps=0.03):
    C = logp.shape[-1]
    onehot = jax.nn.one_hot(gold, C, dtype=jnp.float32)
    target = (1.0 - eps) * onehot + eps / C
    nll = -jnp.sum(target * logp, axis=-1)                      # [B, T]
    w = mask.astype(jnp.float32)
    per_seq = jnp.sum(nll * w, axis=1) / (jnp.sum(w, axis=1) + 1e-13)
    num_non_empty = jnp.sum((jnp.sum(w, axis=1) > 0).astype(jnp.float32)) + 1e-13
    return jnp.sum(per_seq) / num_non_empty


def biaffine_loss(s_arc, rel_gold, arcs, rels, mask):
    # arc CE from the full f32 s_arc rows; rel CE from the in-kernel f32 gold-head gather.
    B, T, _ = s_arc.shape
    R = rel_gold.shape[-1]
    m = mask.reshape(-1).astype(jnp.float32)
    s_arc_f = s_arc.reshape(B * T, T)
    rel_f = rel_gold.reshape(B * T, R)
    arcs_f = arcs.reshape(-1)
    rels_f = rels.reshape(-1)

    def nll(logits, gold):
        logz = jax.nn.logsumexp(logits, axis=-1)
        gold_logit = jnp.take_along_axis(logits, gold[:, None], axis=1)[:, 0]
        return logz - gold_logit

    arc_nll = jnp.where(m > 0, nll(s_arc_f, arcs_f), 0.0)
    rel_nll = jnp.where(m > 0, nll(rel_f, rels_f), 0.0)
    denom = jnp.sum(m) + 1e-13
    return jnp.sum(arc_nll) / denom + jnp.sum(rel_nll) / denom


# ----------------------------------------------------------------------------
# Parameter init (deterministic, synthetic)
# ----------------------------------------------------------------------------
def init_params(key, H, L, n_mlp_arc, n_mlp_rel, num_rels, num_lemmas, num_upos, num_feats):
    ks = iter(jax.random.split(key, 40))

    def lin(k, cin, cout, scale=0.1):
        return (scale * jax.random.normal(k, (cin, cout), jnp.float32),
                jnp.zeros((1, cout), jnp.float32))

    params = {'mix': {}}
    for task in ('lemmas', 'upos', 'deps', 'feats'):
        params['mix'][task] = {'w': 0.1 * jax.random.normal(next(ks), (L,), jnp.float32),
                               'gamma': jnp.float32(1.0)}
    for task, C in (('lemmas', num_lemmas), ('upos', num_upos), ('feats', num_feats)):
        W, b = lin(next(ks), H, C)
        params[task] = {'W': W, 'b': b}

    A, Rm = n_mlp_arc, n_mlp_rel
    wad, bad = lin(next(ks), H, A)
    wah, bah = lin(next(ks), H, A)
    wrd, brd = lin(next(ks), H, Rm)
    wrh, brh = lin(next(ks), H, Rm)
    params['deps'] = {
        'w_arc_d': wad, 'b_arc_d': bad, 'w_arc_h': wah, 'b_arc_h': bah,
        'w_rel_d': wrd, 'b_rel_d': brd, 'w_rel_h': wrh, 'b_rel_h': brh,
        'w_arc_attn': 0.1 * jax.random.normal(next(ks), (A + 1, A), jnp.float32),
        'w_rel_attn': 0.1 * jax.random.normal(next(ks), (num_rels, Rm + 1, Rm + 1), jnp.float32),
    }
    return params


# ----------------------------------------------------------------------------
# Forward pass (mirrors UniversalDependenciesDecoder.forward)
# ----------------------------------------------------------------------------
def ud_decoder_forward(params, prepped, hidden, batch, mask):
    L, B, T, H = hidden.shape
    # the encoder should ideally emit bf16; cast here only if it did not
    hidden_bf = hidden if hidden.dtype == jnp.bfloat16 else hidden.astype(jnp.bfloat16)
    mask_without_root = mask.at[:, 0].set(False)
    mask3 = mask.astype(jnp.float32).reshape(B, 1, T)

    mix = {t: params['mix'][t]['gamma'] * jax.nn.softmax(params['mix'][t]['w'])
           for t in params['mix']}
    mixw = jnp.stack([mix[t] for t in TAG_TASKS + ('deps',)])   # [4, L]

    hidden_flat = hidden_bf.reshape(L, B * T, H)                 # free reshape, no transpose

    # ---- one fused, N-tiled pallas_call: 3 tag heads + the deps scalar mix ----
    logp_all, z_all, mixed_deps = tag_decoder_pallas(
        hidden_flat, mixw, prepped['tag']['w_all'], prepped['tag']['b_all'])

    logits = {}
    class_probabilities = {}
    output = {'logits': logits, 'class_probabilities': class_probabilities}
    loss = jnp.float32(0.0)
    arc = batch.get('arc', None)
    N = B * T

    for i, task in enumerate(TAG_TASKS):
        C = prepped['tag']['class_counts'][i]
        lp = logp_all[i, :N, :C].reshape(B, T, C)
        z = z_all[i, :N, :].reshape(B, T, 1)
        logits[task] = lp + z                                    # exact logits reconstruction
        class_probabilities[task] = jnp.exp(lp)
        gold = batch.get(GOLD_KEYS[task], None)
        if gold is not None:
            loss = loss + smoothed_sequence_ce(lp, gold, mask_without_root, eps=0.03)

    # ---- deps (biaffine) head on the pre-mixed hidden ----
    mixed_bth = mixed_deps[:N].reshape(B, T, H)
    arcs_in = (arc if arc is not None else jnp.zeros((B, T), jnp.int32)).astype(jnp.int32)
    s_arc, s_rel_raw, rel_gold = biaffine_pallas(mixed_bth, mask3, arcs_in, prepped['deps'])
    s_rel = jnp.transpose(s_rel_raw, (0, 1, 3, 2))               # [B, T, T, R] (module convention)
    class_probabilities['deps'] = {'s_arc': s_arc, 's_rel': s_rel}
    if arc is not None:
        loss = loss + biaffine_loss(s_arc, rel_gold, arc, batch['rel_id'], mask_without_root)
        output['loss'] = loss
    return output


# ----------------------------------------------------------------------------
if __name__ == "__main__":
    key = jax.random.PRNGKey(0)
    L, B, T, H = 13, 2, 32, 32
    n_mlp_arc, n_mlp_rel = 16, 8
    num_rels, num_lemmas, num_upos, num_feats = 6, 11, 17, 9

    k_hidden, k_param, k_arc, k_rel, k_lem, k_pos, k_feat = jax.random.split(key, 7)
    hidden = jax.random.normal(k_hidden, (L, B, T, H), jnp.float32)
    mask = jnp.ones((B, T), dtype=bool).at[1, T - 1].set(False)
    batch = {
        'arc': jax.random.randint(k_arc, (B, T), 0, T - 1),        # gold heads (avoid padded col)
        'rel_id': jax.random.randint(k_rel, (B, T), 0, num_rels),
        'lemma_id': jax.random.randint(k_lem, (B, T), 0, num_lemmas),
        'pos_id': jax.random.randint(k_pos, (B, T), 0, num_upos),
        'feat_id': jax.random.randint(k_feat, (B, T), 0, num_feats),
    }
    params = init_params(k_param, H, L, n_mlp_arc, n_mlp_rel,
                         num_rels, num_lemmas, num_upos, num_feats)
    prepped = prepare_all(params)        # weight padding/packing hoisted out of the step

    out = ud_decoder_forward(params, prepped, hidden, batch, mask)
    out = jax.block_until_ready(out)

    assert bool(jnp.isfinite(out['loss'])), "loss is not finite"
    assert out['class_probabilities']['deps']['s_arc'].shape == (B, T, T)
    assert out['class_probabilities']['deps']['s_rel'].shape == (B, T, T, num_rels)
    assert out['logits']['upos'].shape == (B, T, num_upos)
    assert out['logits']['lemmas'].shape == (B, T, num_lemmas)
    assert out['logits']['feats'].shape == (B, T, num_feats)
    p = out['class_probabilities']['upos']
    assert bool(jnp.allclose(jnp.sum(p, axis=-1), 1.0, atol=1e-4)), "softmax not normalized"
    print("KERNEL_OK")
</pallas_src>

<mosaic_0001>
module attributes {stable_mosaic.version = 11 : i64} {
  func.func @tag_kernel(%arg0: i32, %arg1: memref<4x13xf32, #tpu.memory_space<smem>>, %arg2: memref<13x16x32xbf16, #tpu.memory_space<vmem>>, %arg3: memref<3x32x128xf32, #tpu.memory_space<vmem>>, %arg4: memref<3x1x128xf32, #tpu.memory_space<vmem>>, %arg5: memref<3x16x128xf32, #tpu.memory_space<vmem>>, %arg6: memref<3x16x1xf32, #tpu.memory_space<vmem>>, %arg7: memref<16x32xf32, #tpu.memory_space<vmem>>) attributes {dimension_semantics = [#tpu.dimension_semantics<parallel>], iteration_bounds = array<i64: 4>, scalar_prefetch = 0 : i64, scratch_operands = 0 : i64, tpu.core_type = #tpu.core_type<tc>, window_params = [{transform_indices = @transform_0, window_bounds = array<i64: 4, 13>}, {transform_indices = @transform_1, window_bounds = array<i64: 13, 16, 32>}, {pipeline_mode = #tpu.pipeline_mode<synchronous>, transform_indices = @transform_2, window_bounds = array<i64: 3, 32, 128>}, {pipeline_mode = #tpu.pipeline_mode<synchronous>, transform_indices = @transform_3, window_bounds = array<i64: 3, 1, 128>}, {transform_indices = @transform_4, window_bounds = array<i64: 3, 16, 128>}, {transform_indices = @transform_5, window_bounds = array<i64: 3, 16, 1>}, {transform_indices = @transform_6, window_bounds = array<i64: 16, 32>}]} {
    %c0 = arith.constant 0 : index
    %c0_0 = arith.constant 0 : index
    %0 = memref.load %arg1[%c0, %c0_0] : memref<4x13xf32, #tpu.memory_space<smem>>
    %c0_1 = arith.constant 0 : index
    %c0_2 = arith.constant 0 : index
    %c0_3 = arith.constant 0 : index
    %1 = vector.load %arg2[%c0_1, %c0_2, %c0_3] : memref<13x16x32xbf16, #tpu.memory_space<vmem>>, vector<1x16x32xbf16>
    %2 = vector.shape_cast %1 : vector<1x16x32xbf16> to vector<16x32xbf16>
    %3 = arith.extf %2 : vector<16x32xbf16> to vector<16x32xf32>
    %4 = vector.broadcast %0 : f32 to vector<16x32xf32>
    %5 = arith.mulf %4, %3 : vector<16x32xf32>
    %c0_4 = arith.constant 0 : index
    %c1 = arith.constant 1 : index
    %6 = memref.load %arg1[%c0_4, %c1] : memref<4x13xf32, #tpu.memory_space<smem>>
    %c1_5 = arith.constant 1 : index
    %c0_6 = arith.constant 0 : index
    %c0_7 = arith.constant 0 : index
    %7 = vector.load %arg2[%c1_5, %c0_6, %c0_7] : memref<13x16x32xbf16, #tpu.memory_space<vmem>>, vector<1x16x32xbf16>
    %8 = vector.shape_cast %7 : vector<1x16x32xbf16> to vector<16x32xbf16>
    %9 = arith.extf %8 : vector<16x32xbf16> to vector<16x32xf32>
    %10 = vector.broadcast %6 : f32 to vector<16x32xf32>
    %11 = arith.mulf %10, %9 : vector<16x32xf32>
    %12 = arith.addf %5, %11 : vector<16x32xf32>
    %c0_8 = arith.constant 0 : index
    %c2 = arith.constant 2 : index
    %13 = memref.load %arg1[%c0_8, %c2] : memref<4x13xf32, #tpu.memory_space<smem>>
    %c2_9 = arith.constant 2 : index
    %c0_10 = arith.constant 0 : index
    %c0_11 = arith.constant 0 : index
    %14 = vector.load %arg2[%c2_9, %c0_10, %c0_11] : memref<13x16x32xbf16, #tpu.memory_space<vmem>>, vector<1x16x32xbf16>
    %15 = vector.shape_cast %14 : vector<1x16x32xbf16> to vector<16x32xbf16>
    %16 = arith.extf %15 : vector<16x32xbf16> to vector<16x32xf32>
    %17 = vector.broadcast %13 : f32 to vector<16x32xf32>
    %18 = arith.mulf %17, %16 : vector<16x32xf32>
    %19 = arith.addf %12, %18 : vector<16x32xf32>
    %c0_12 = arith.constant 0 : index
    %c3 = arith.constant 3 : index
    %20 = memref.load %arg1[%c0_12, %c3] : memref<4x13xf32, #tpu.memory_space<smem>>
    %c3_13 = arith.constant 3 : index
    %c0_14 = arith.constant 0 : index
    %c0_15 = arith.constant 0 : index
    %21 = vector.load %arg2[%c3_13, %c0_14, %c0_15] : memref<13x16x32xbf16, #tpu.memory_space<vmem>>, vector<1x16x32xbf16>
    %22 = vector.shape_cast %21 : vector<1x16x32xbf16> to vector<16x32xbf16>
    %23 = arith.extf %22 : vector<16x32xbf16> to vector<16x32xf32>
    %24 = vector.broadcast %20 : f32 to vector<16x32xf32>
    %25 = arith.mulf %24, %23 : vector<16x32xf32>
    %26 = arith.addf %19, %25 : vector<16x32xf32>
    %c0_16 = arith.constant 0 : index
    %c4 = arith.constant 4 : index
    %27 = memref.load %arg1[%c0_16, %c4] : memref<4x13xf32, #tpu.memory_space<smem>>
    %c4_17 = arith.constant 4 : index
    %c0_18 = arith.constant 0 : index
    %c0_19 = arith.constant 0 : index
    %28 = vector.load %arg2[%c4_17, %c0_18, %c0_19] : memref<13x16x32xbf16, #tpu.memory_space<vmem>>, vector<1x16x32xbf16>
    %29 = vector.shape_cast %28 : vector<1x16x32xbf16> to vector<16x32xbf16>
    %30 = arith.extf %29 : vector<16x32xbf16> to vector<16x32xf32>
    %31 = vector.broadcast %27 : f32 to vector<16x32xf32>
    %32 = arith.mulf %31, %30 : vector<16x32xf32>
    %33 = arith.addf %26, %32 : vector<16x32xf32>
    %c0_20 = arith.constant 0 : index
    %c5 = arith.constant 5 : index
    %34 = memref.load %arg1[%c0_20, %c5] : memref<4x13xf32, #tpu.memory_space<smem>>
    %c5_21 = arith.constant 5 : index
    %c0_22 = arith.constant 0 : index
    %c0_23 = arith.constant 0 : index
    %35 = vector.load %arg2[%c5_21, %c0_22, %c0_23] : memref<13x16x32xbf16, #tpu.memory_space<vmem>>, vector<1x16x32xbf16>
    %36 = vector.shape_cast %35 : vector<1x16x32xbf16> to vector<16x32xbf16>
    %37 = arith.extf %36 : vector<16x32xbf16> to vector<16x32xf32>
    %38 = vector.broadcast %34 : f32 to vector<16x32xf32>
    %39 = arith.mulf %38, %37 : vector<16x32xf32>
    %40 = arith.addf %33, %39 : vector<16x32xf32>
    %c0_24 = arith.constant 0 : index
    %c6 = arith.constant 6 : index
    %41 = memref.load %arg1[%c0_24, %c6] : memref<4x13xf32, #tpu.memory_space<smem>>
    %c6_25 = arith.constant 6 : index
    %c0_26 = arith.constant 0 : index
    %c0_27 = arith.constant 0 : index
    %42 = vector.load %arg2[%c6_25, %c0_26, %c0_27] : memref<13x16x32xbf16, #tpu.memory_space<vmem>>, vector<1x16x32xbf16>
    %43 = vector.shape_cast %42 : vector<1x16x32xbf16> to vector<16x32xbf16>
    %44 = arith.extf %43 : vector<16x32xbf16> to vector<16x32xf32>
    %45 = vector.broadcast %41 : f32 to vector<16x32xf32>
    %46 = arith.mulf %45, %44 : vector<16x32xf32>
    %47 = arith.addf %40, %46 : vector<16x32xf32>
    %c0_28 = arith.constant 0 : index
    %c7 = arith.constant 7 : index
    %48 = memref.load %arg1[%c0_28, %c7] : memref<4x13xf32, #tpu.memory_space<smem>>
    %c7_29 = arith.constant 7 : index
    %c0_30 = arith.constant 0 : index
    %c0_31 = arith.constant 0 : index
    %49 = vector.load %arg2[%c7_29, %c0_30, %c0_31] : memref<13x16x32xbf16, #tpu.memory_space<vmem>>, vector<1x16x32xbf16>
    %50 = vector.shape_cast %49 : vector<1x16x32xbf16> to vector<16x32xbf16>
    %51 = arith.extf %50 : vector<16x32xbf16> to vector<16x32xf32>
    %52 = vector.broadcast %48 : f32 to vector<16x32xf32>
    %53 = arith.mulf %52, %51 : vector<16x32xf32>
    %54 = arith.addf %47, %53 : vector<16x32xf32>
    %c0_32 = arith.constant 0 : index
    %c8 = arith.constant 8 : index
    %55 = memref.load %arg1[%c0_32, %c8] : memref<4x13xf32, #tpu.memory_space<smem>>
    %c8_33 = arith.constant 8 : index
    %c0_34 = arith.constant 0 : index
    %c0_35 = arith.constant 0 : index
    %56 = vector.load %arg2[%c8_33, %c0_34, %c0_35] : memref<13x16x32xbf16, #tpu.memory_space<vmem>>, vector<1x16x32xbf16>
    %57 = vector.shape_cast %56 : vector<1x16x32xbf16> to vector<16x32xbf16>
    %58 = arith.extf %57 : vector<16x32xbf16> to vector<16x32xf32>
    %59 = vector.broadcast %55 : f32 to vector<16x32xf32>
    %60 = arith.mulf %59, %58 : vector<16x32xf32>
    %61 = arith.addf %54, %60 : vector<16x32xf32>
    %c0_36 = arith.constant 0 : index
    %c9 = arith.constant 9 : index
    %62 = memref.load %arg1[%c0_36, %c9] : memref<4x13xf32, #tpu.memory_space<smem>>
    %c9_37 = arith.constant 9 : index
    %c0_38 = arith.constant 0 : index
    %c0_39 = arith.constant 0 : index
    %63 = vector.load %arg2[%c9_37, %c0_38, %c0_39] : memref<13x16x32xbf16, #tpu.memory_space<vmem>>, vector<1x16x32xbf16>
    %64 = vector.shape_cast %63 : vector<1x16x32xbf16> to vector<16x32xbf16>
    %65 = arith.extf %64 : vector<16x32xbf16> to vector<16x32xf32>
    %66 = vector.broadcast %62 : f32 to vector<16x32xf32>
    %67 = arith.mulf %66, %65 : vector<16x32xf32>
    %68 = arith.addf %61, %67 : vector<16x32xf32>
    %c0_40 = arith.constant 0 : index
    %c10 = arith.constant 10 : index
    %69 = memref.load %arg1[%c0_40, %c10] : memref<4x13xf32, #tpu.memory_space<smem>>
    %c10_41 = arith.constant 10 : index
    %c0_42 = arith.constant 0 : index
    %c0_43 = arith.constant 0 : index
    %70 = vector.load %arg2[%c10_41, %c0_42, %c0_43] : memref<13x16x32xbf16, #tpu.memory_space<vmem>>, vector<1x16x32xbf16>
    %71 = vector.shape_cast %70 : vector<1x16x32xbf16> to vector<16x32xbf16>
    %72 = arith.extf %71 : vector<16x32xbf16> to vector<16x32xf32>
    %73 = vector.broadcast %69 : f32 to vector<16x32xf32>
    %74 = arith.mulf %73, %72 : vector<16x32xf32>
    %75 = arith.addf %68, %74 : vector<16x32xf32>
    %c0_44 = arith.constant 0 : index
    %c11 = arith.constant 11 : index
    %76 = memref.load %arg1[%c0_44, %c11] : memref<4x13xf32, #tpu.memory_space<smem>>
    %c11_45 = arith.constant 11 : index
    %c0_46 = arith.constant 0 : index
    %c0_47 = arith.constant 0 : index
    %77 = vector.load %arg2[%c11_45, %c0_46, %c0_47] : memref<13x16x32xbf16, #tpu.memory_space<vmem>>, vector<1x16x32xbf16>
    %78 = vector.shape_cast %77 : vector<1x16x32xbf16> to vector<16x32xbf16>
    %79 = arith.extf %78 : vector<16x32xbf16> to vector<16x32xf32>
    %80 = vector.broadcast %76 : f32 to vector<16x32xf32>
    %81 = arith.mulf %80, %79 : vector<16x32xf32>
    %82 = arith.addf %75, %81 : vector<16x32xf32>
    %c0_48 = arith.constant 0 : index
    %c12 = arith.constant 12 : index
    %83 = memref.load %arg1[%c0_48, %c12] : memref<4x13xf32, #tpu.memory_space<smem>>
    %c12_49 = arith.constant 12 : index
    %c0_50 = arith.constant 0 : index
    %c0_51 = arith.constant 0 : index
    %84 = vector.load %arg2[%c12_49, %c0_50, %c0_51] : memref<13x16x32xbf16, #tpu.memory_space<vmem>>, vector<1x16x32xbf16>
    %85 = vector.shape_cast %84 : vector<1x16x32xbf16> to vector<16x32xbf16>
    %86 = arith.extf %85 : vector<16x32xbf16> to vector<16x32xf32>
    %87 = vector.broadcast %83 : f32 to vector<16x32xf32>
    %88 = arith.mulf %87, %86 : vector<16x32xf32>
    %89 = arith.addf %82, %88 : vector<16x32xf32>
    %c0_52 = arith.constant 0 : index
    %c0_53 = arith.constant 0 : index
    %c0_54 = arith.constant 0 : index
    %90 = vector.load %arg3[%c0_52, %c0_53, %c0_54] : memref<3x32x128xf32, #tpu.memory_space<vmem>>, vector<1x32x128xf32>
    %91 = vector.shape_cast %90 : vector<1x32x128xf32> to vector<32x128xf32>
    %cst = arith.constant dense<0.000000e+00> : vector<16x128xf32>
    %92 = tpu.matmul %89, %91, %cst {dimension_numbers = #tpu.dot_dimension_numbers<[1], [0], [0], [1], [0, 0, 1, 1], [], []>} : vector<16x32xf32>, vector<32x128xf32>, vector<16x128xf32> -> vector<16x128xf32>
    %c0_55 = arith.constant 0 : index
    %c0_56 = arith.constant 0 : index
    %c0_57 = arith.constant 0 : index
    %93 = vector.load %arg4[%c0_55, %c0_56, %c0_57] : memref<3x1x128xf32, #tpu.memory_space<vmem>>, vector<1x1x128xf32>
    %94 = vector.shape_cast %93 : vector<1x1x128xf32> to vector<1x128xf32>
    %95 = vector.broadcast %94 : vector<1x128xf32> to vector<16x128xf32>
    %96 = arith.addf %92, %95 : vector<16x128xf32>
    %cst_58 = arith.constant dense<0xFF800000> : vector<16xf32>
    %97 = vector.multi_reduction <maximumf>, %96, %cst_58 [1] : vector<16x128xf32> to vector<16xf32>
    %98 = vector.shape_cast %97 : vector<16xf32> to vector<16x1xf32>
    %99 = vector.broadcast %98 : vector<16x1xf32> to vector<16x128xf32>
    %100 = arith.subf %96, %99 : vector<16x128xf32>
    %101 = math.exp %100 : vector<16x128xf32>
    %cst_59 = arith.constant dense<0.000000e+00> : vector<16xf32>
    %102 = vector.multi_reduction <add>, %101, %cst_59 [1] : vector<16x128xf32> to vector<16xf32>
    %103 = vector.shape_cast %102 : vector<16xf32> to vector<16x1xf32>
    %104 = math.log %103 : vector<16x1xf32>
    %105 = vector.broadcast %104 : vector<16x1xf32> to vector<16x128xf32>
    %106 = arith.subf %100, %105 : vector<16x128xf32>
    %c0_60 = arith.constant 0 : index
    %c0_61 = arith.constant 0 : index
    %c0_62 = arith.constant 0 : index
    %107 = vector.load %arg5[%c0_60, %c0_61, %c0_62] : memref<3x16x128xf32, #tpu.memory_space<vmem>>, vector<1x16x128xf32>
    %108 = vector.shape_cast %107 : vector<1x16x128xf32> to vector<16x128xf32>
    %109 = vector.shape_cast %106 : vector<16x128xf32> to vector<1x16x128xf32>
    tpu.vector_store %arg5[%c0_60, %c0_61, %c0_62], %109 {strides = array<i32>} : memref<3x16x128xf32, #tpu.memory_space<vmem>>, vector<1x16x128xf32>,
    %110 = arith.addf %98, %104 : vector<16x1xf32>
    %c0_63 = arith.constant 0 : index
    %c0_64 = arith.constant 0 : index
    %c0_65 = arith.constant 0 : index
    %111 = vector.load %arg6[%c0_63, %c0_64, %c0_65] : memref<3x16x1xf32, #tpu.memory_space<vmem>>, vector<1x16x1xf32>
    %112 = vector.shape_cast %111 : vector<1x16x1xf32> to vector<16x1xf32>
    %113 = vector.shape_cast %110 : vector<16x1xf32> to vector<1x16x1xf32>
    tpu.vector_store %arg6[%c0_63, %c0_64, %c0_65], %113 {strides = array<i32>} : memref<3x16x1xf32, #tpu.memory_space<vmem>>, vector<1x16x1xf32>,
    %c1_66 = arith.constant 1 : index
    %c0_67 = arith.constant 0 : index
    %114 = memref.load %arg1[%c1_66, %c0_67] : memref<4x13xf32, #tpu.memory_space<smem>>
    %c0_68 = arith.constant 0 : index
    %c0_69 = arith.constant 0 : index
    %c0_70 = arith.constant 0 : index
    %115 = vector.load %arg2[%c0_68, %c0_69, %c0_70] : memref<13x16x32xbf16, #tpu.memory_space<vmem>>, vector<1x16x32xbf16>
    %116 = vector.shape_cast %115 : vector<1x16x32xbf16> to vector<16x32xbf16>
    %117 = arith.extf %116 : vector<16x32xbf16> to vector<16x32xf32>
    %118 = vector.broadcast %114 : f32 to vector<16x32xf32>
    %119 = arith.mulf %118, %117 : vector<16x32xf32>
    %c1_71 = arith.constant 1 : index
    %c1_72 = arith.constant 1 : index
    %120 = memref.load %arg1[%c1_71, %c1_72] : memref<4x13xf32, #tpu.memory_space<smem>>
    %c1_73 = arith.constant 1 : index
    %c0_74 = arith.constant 0 : index
    %c0_75 = arith.constant 0 : index
    %121 = vector.load %arg2[%c1_73, %c0_74, %c0_75] : memref<13x16x32xbf16, #tpu.memory_space<vmem>>, vector<1x16x32xbf16>
    %122 = vector.shape_cast %121 : vector<1x16x32xbf16> to vector<16x32xbf16>
    %123 = arith.extf %122 : vector<16x32xbf16> to vector<16x32xf32>
    %124 = vector.broadcast %120 : f32 to vector<16x32xf32>
    %125 = arith.mulf %124, %123 : vector<16x32xf32>
    %126 = arith.addf %119, %125 : vector<16x32xf32>
    %c1_76 = arith.constant 1 : index
    %c2_77 = arith.constant 2 : index
    %127 = memref.load %arg1[%c1_76, %c2_77] : memref<4x13xf32, #tpu.memory_space<smem>>
    %c2_78 = arith.constant 2 : index
    %c0_79 = arith.constant 0 : index
    %c0_80 = arith.constant 0 : index
    %128 = vector.load %arg2[%c2_78, %c0_79, %c0_80] : memref<13x16x32xbf16, #tpu.memory_space<vmem>>, vector<1x16x32xbf16>
    %129 = vector.shape_cast %128 : vector<1x16x32xbf16> to vector<16x32xbf16>
    %130 = arith.extf %129 : vector<16x32xbf16> to vector<16x32xf32>
    %131 = vector.broadcast %127 : f32 to vector<16x32xf32>
    %132 = arith.mulf %131, %130 : vector<16x32xf32>
    %133 = arith.addf %126, %132 : vector<16x32xf32>
    %c1_81 = arith.constant 1 : index
    %c3_82 = arith.constant 3 : index
    %134 = memref.load %arg1[%c1_81, %c3_82] : memref<4x13xf32, #tpu.memory_space<smem>>
    %c3_83 = arith.constant 3 : index
    %c0_84 = arith.constant 0 : index
    %c0_85 = arith.constant 0 : index
    %135 = vector.load %arg2[%c3_83, %c0_84, %c0_85] : memref<13x16x32xbf16, #tpu.memory_space<vmem>>, vector<1x16x32xbf16>
    %136 = vector.shape_cast %135 : vector<1x16x32xbf16> to vector<16x32xbf16>
    %137 = arith.extf %136 : vector<16x32xbf16> to vector<16x32xf32>
    %138 = vector.broadcast %134 : f32 to vector<16x32xf32>
    %139 = arith.mulf %138, %137 : vector<16x32xf32>
    %140 = arith.addf %133, %139 : vector<16x32xf32>
    %c1_86 = arith.constant 1 : index
    %c4_87 = arith.constant 4 : index
    %141 = memref.load %arg1[%c1_86, %c4_87] : memref<4x13xf32, #tpu.memory_space<smem>>
    %c4_88 = arith.constant 4 : index
    %c0_89 = arith.constant 0 : index
    %c0_90 = arith.constant 0 : index
    %142 = vector.load %arg2[%c4_88, %c0_89, %c0_90] : memref<13x16x32xbf16, #tpu.memory_space<vmem>>, vector<1x16x32xbf16>
    %143 = vector.shape_cast %142 : vector<1x16x32xbf16> to vector<16x32xbf16>
    %144 = arith.extf %143 : vector<16x32xbf16> to vector<16x32xf32>
    %145 = vector.broadcast %141 : f32 to vector<16x32xf32>
    %146 = arith.mulf %145, %144 : vector<16x32xf32>
    %147 = arith.addf %140, %146 : vector<16x32xf32>
    %c1_91 = arith.constant 1 : index
    %c5_92 = arith.constant 5 : index
    %148 = memref.load %arg1[%c1_91, %c5_92] : memref<4x13xf32, #tpu.memory_space<smem>>
    %c5_93 = arith.constant 5 : index
    %c0_94 = arith.constant 0 : index
    %c0_95 = arith.constant 0 : index
    %149 = vector.load %arg2[%c5_93, %c0_94, %c0_95] : memref<13x16x32xbf16, #tpu.memory_space<vmem>>, vector<1x16x32xbf16>
    %150 = vector.shape_cast %149 : vector<1x16x32xbf16> to vector<16x32xbf16>
    %151 = arith.extf %150 : vector<16x32xbf16> to vector<16x32xf32>
    %152 = vector.broadcast %148 : f32 to vector<16x32xf32>
    %153 = arith.mulf %152, %151 : vector<16x32xf32>
    %154 = arith.addf %147, %153 : vector<16x32xf32>
    %c1_96 = arith.constant 1 : index
    %c6_97 = arith.constant 6 : index
    %155 = memref.load %arg1[%c1_96, %c6_97] : memref<4x13xf32, #tpu.memory_space<smem>>
    %c6_98 = arith.constant 6 : index
    %c0_99 = arith.constant 0 : index
    %c0_100 = arith.constant 0 : index
    %156 = vector.load %arg2[%c6_98, %c0_99, %c0_100] : memref<13x16x32xbf16, #tpu.memory_space<vmem>>, vector<1x16x32xbf16>
    %157 = vector.shape_cast %156 : vector<1x16x32xbf16> to vector<16x32xbf16>
    %158 = arith.extf %157 : vector<16x32xbf16> to vector<16x32xf32>
    %159 = vector.broadcast %155 : f32 to vector<16x32xf32>
    %160 = arith.mulf %159, %158 : vector<16x32xf32>
    %161 = arith.addf %154, %160 : vector<16x32xf32>
    %c1_101 = arith.constant 1 : index
    %c7_102 = arith.constant 7 : index
    %162 = memref.load %arg1[%c1_101, %c7_102] : memref<4x13xf32, #tpu.memory_space<smem>>
    %c7_103 = arith.constant 7 : index
    %c0_104 = arith.constant 0 : index
    %c0_105 = arith.constant 0 : index
    %163 = vector.load %arg2[%c7_103, %c0_104, %c0_105] : memref<13x16x32xbf16, #tpu.memory_space<vmem>>, vector<1x16x32xbf16>
    %164 = vector.shape_cast %163 : vector<1x16x32xbf16> to vector<16x32xbf16>
    %165 = arith.extf %164 : vector<16x32xbf16> to vector<16x32xf32>
    %166 = vector.broadcast %162 : f32 to vector<16x32xf32>
    %167 = arith.mulf %166, %165 : vector<16x32xf32>
    %168 = arith.addf %161, %167 : vector<16x32xf32>
    %c1_106 = arith.constant 1 : index
    %c8_107 = arith.constant 8 : index
    %169 = memref.load %arg1[%c1_106, %c8_107] : memref<4x13xf32, #tpu.memory_space<smem>>
    %c8_108 = arith.constant 8 : index
    %c0_109 = arith.constant 0 : index
    %c0_110 = arith.constant 0 : index
    %170 = vector.load %arg2[%c8_108, %c0_109, %c0_110] : memref<13x16x32xbf16, #tpu.memory_space<vmem>>, vector<1x16x32xbf16>
    %171 = vector.shape_cast %170 : vector<1x16x32xbf16> to vector<16x32xbf16>
    %172 = arith.extf %171 : vector<16x32xbf16> to vector<16x32xf32>
    %173 = vector.broadcast %169 : f32 to vector<16x32xf32>
    %174 = arith.mulf %173, %172 : vector<16x32xf32>
    %175 = arith.addf %168, %174 : vector<16x32xf32>
    %c1_111 = arith.constant 1 : index
    %c9_112 = arith.constant 9 : index
    %176 = memref.load %arg1[%c1_111, %c9_112] : memref<4x13xf32, #tpu.memory_space<smem>>
    %c9_113 = arith.constant 9 : index
    %c0_114 = arith.constant 0 : index
    %c0_115 = arith.constant 0 : index
    %177 = vector.load %arg2[%c9_113, %c0_114, %c0_115] : memref<13x16x32xbf16, #tpu.memory_space<vmem>>, vector<1x16x32xbf16>
    %178 = vector.shape_cast %177 : vector<1x16x32xbf16> to vector<16x32xbf16>
    %179 = arith.extf %178 : vector<16x32xbf16> to vector<16x32xf32>
    %180 = vector.broadcast %176 : f32 to vector<16x32xf32>
    %181 = arith.mulf %180, %179 : vector<16x32xf32>
    %182 = arith.addf %175, %181 : vector<16x32xf32>
    %c1_116 = arith.constant 1 : index
    %c10_117 = arith.constant 10 : index
    %183 = memref.load %arg1[%c1_116, %c10_117] : memref<4x13xf32, #tpu.memory_space<smem>>
    %c10_118 = arith.constant 10 : index
    %c0_119 = arith.constant 0 : index
    %c0_120 = arith.constant 0 : index
    %184 = vector.load %arg2[%c10_118, %c0_119, %c0_120] : memref<13x16x32xbf16, #tpu.memory_space<vmem>>, vector<1x16x32xbf16>
    %185 = vector.shape_cast %184 : vector<1x16x32xbf16> to vector<16x32xbf16>
    %186 = arith.extf %185 : vector<16x32xbf16> to vector<16x32xf32>
    %187 = vector.broadcast %183 : f32 to vector<16x32xf32>
    %188 = arith.mulf %187, %186 : vector<16x32xf32>
    %189 = arith.addf %182, %188 : vector<16x32xf32>
    %c1_121 = arith.constant 1 : index
    %c11_122 = arith.constant 11 : index
    %190 = memref.load %arg1[%c1_121, %c11_122] : memref<4x13xf32, #tpu.memory_space<smem>>
    %c11_123 = arith.constant 11 : index
    %c0_124 = arith.constant 0 : index
    %c0_125 = arith.constant 0 : index
    %191 = vector.load %arg2[%c11_123, %c0_124, %c0_125] : memref<13x16x32xbf16, #tpu.memory_space<vmem>>, vector<1x16x32xbf16>
    %192 = vector.shape_cast %191 : vector<1x16x32xbf16> to vector<16x32xbf16>
    %193 = arith.extf %192 : vector<16x32xbf16> to vector<16x32xf32>
    %194 = vector.broadcast %190 : f32 to vector<16x32xf32>
    %195 = arith.mulf %194, %193 : vector<16x32xf32>
    %196 = arith.addf %189, %195 : vector<16x32xf32>
    %c1_126 = arith.constant 1 : index
    %c12_127 = arith.constant 12 : index
    %197 = memref.load %arg1[%c1_126, %c12_127] : memref<4x13xf32, #tpu.memory_space<smem>>
    %c12_128 = arith.constant 12 : index
    %c0_129 = arith.constant 0 : index
    %c0_130 = arith.constant 0 : index
    %198 = vector.load %arg2[%c12_128, %c0_129, %c0_130] : memref<13x16x32xbf16, #tpu.memory_space<vmem>>, vector<1x16x32xbf16>
    %199 = vector.shape_cast %198 : vector<1x16x32xbf16> to vector<16x32xbf16>
    %200 = arith.extf %199 : vector<16x32xbf16> to vector<16x32xf32>
    %201 = vector.broadcast %197 : f32 to vector<16x32xf32>
    %202 = arith.mulf %201, %200 : vector<16x32xf32>
    %203 = arith.addf %196, %202 : vector<16x32xf32>
    %c1_131 = arith.constant 1 : index
    %c0_132 = arith.constant 0 : index
    %c0_133 = arith.constant 0 : index
    %204 = vector.load %arg3[%c1_131, %c0_132, %c0_133] : memref<3x32x128xf32, #tpu.memory_space<vmem>>, vector<1x32x128xf32>
    %205 = vector.shape_cast %204 : vector<1x32x128xf32> to vector<32x128xf32>
    %cst_134 = arith.constant dense<0.000000e+00> : vector<16x128xf32>
    %206 = tpu.matmul %203, %205, %cst_134 {dimension_numbers = #tpu.dot_dimension_numbers<[1], [0], [0], [1], [0, 0, 1, 1], [], []>} : vector<16x32xf32>, vector<32x128xf32>, vector<16x128xf32> -> vector<16x128xf32>
    %c1_135 = arith.constant 1 : index
    %c0_136 = arith.constant 0 : index
    %c0_137 = arith.constant 0 : index
    %207 = vector.load %arg4[%c1_135, %c0_136, %c0_137] : memref<3x1x128xf32, #tpu.memory_space<vmem>>, vector<1x1x128xf32>
    %208 = vector.shape_cast %207 : vector<1x1x128xf32> to vector<1x128xf32>
    %209 = vector.broadcast %208 : vector<1x128xf32> to vector<16x128xf32>
    %210 = arith.addf %206, %209 : vector<16x128xf32>
    %cst_138 = arith.constant dense<0xFF800000> : vector<16xf32>
    %211 = vector.multi_reduction <maximumf>, %210, %cst_138 [1] : vector<16x128xf32> to vector<16xf32>
    %212 = vector.shape_cast %211 : vector<16xf32> to vector<16x1xf32>
    %213 = vector.broadcast %212 : vector<16x1xf32> to vector<16x128xf32>
    %214 = arith.subf %210, %213 : vector<16x128xf32>
    %215 = math.exp %214 : vector<16x128xf32>
    %cst_139 = arith.constant dense<0.000000e+00> : vector<16xf32>
    %216 = vector.multi_reduction <add>, %215, %cst_139 [1] : vector<16x128xf32> to vector<16xf32>
    %217 = vector.shape_cast %216 : vector<16xf32> to vector<16x1xf32>
    %218 = math.log %217 : vector<16x1xf32>
    %219 = vector.broadcast %218 : vector<16x1xf32> to vector<16x128xf32>
    %220 = arith.subf %214, %219 : vector<16x128xf32>
    %c1_140 = arith.constant 1 : index
    %c0_141 = arith.constant 0 : index
    %c0_142 = arith.constant 0 : index
    %221 = vector.load %arg5[%c1_140, %c0_141, %c0_142] : memref<3x16x128xf32, #tpu.memory_space<vmem>>, vector<1x16x128xf32>
    %222 = vector.shape_cast %221 : vector<1x16x128xf32> to vector<16x128xf32>
    %223 = vector.shape_cast %220 : vector<16x128xf32> to vector<1x16x128xf32>
    tpu.vector_store %arg5[%c1_140, %c0_141, %c0_142], %223 {strides = array<i32>} : memref<3x16x128xf32, #tpu.memory_space<vmem>>, vector<1x16x128xf32>,
    %224 = arith.addf %212, %218 : vector<16x1xf32>
    %c1_143 = arith.constant 1 : index
    %c0_144 = arith.constant 0 : index
    %c0_145 = arith.constant 0 : index
    %225 = vector.load %arg6[%c1_143, %c0_144, %c0_145] : memref<3x16x1xf32, #tpu.memory_space<vmem>>, vector<1x16x1xf32>
    %226 = vector.shape_cast %225 : vector<1x16x1xf32> to vector<16x1xf32>
    %227 = vector.shape_cast %224 : vector<16x1xf32> to vector<1x16x1xf32>
    tpu.vector_store %arg6[%c1_143, %c0_144, %c0_145], %227 {strides = array<i32>} : memref<3x16x1xf32, #tpu.memory_space<vmem>>, vector<1x16x1xf32>,
    %c2_146 = arith.constant 2 : index
    %c0_147 = arith.constant 0 : index
    %228 = memref.load %arg1[%c2_146, %c0_147] : memref<4x13xf32, #tpu.memory_space<smem>>
    %c0_148 = arith.constant 0 : index
    %c0_149 = arith.constant 0 : index
    %c0_150 = arith.constant 0 : index
    %229 = vector.load %arg2[%c0_148, %c0_149, %c0_150] : memref<13x16x32xbf16, #tpu.memory_space<vmem>>, vector<1x16x32xbf16>
    %230 = vector.shape_cast %229 : vector<1x16x32xbf16> to vector<16x32xbf16>
    %231 = arith.extf %230 : vector<16x32xbf16> to vector<16x32xf32>
    %232 = vector.broadcast %228 : f32 to vector<16x32xf32>
    %233 = arith.mulf %232, %231 : vector<16x32xf32>
    %c2_151 = arith.constant 2 : index
    %c1_152 = arith.constant 1 : index
    %234 = memref.load %arg1[%c2_151, %c1_152] : memref<4x13xf32, #tpu.memory_space<smem>>
    %c1_153 = arith.constant 1 : index
    %c0_154 = arith.constant 0 : index
    %c0_155 = arith.constant 0 : index
    %235 = vector.load %arg2[%c1_153, %c0_154, %c0_155] : memref<13x16x32xbf16, #tpu.memory_space<vmem>>, vector<1x16x32xbf16>
    %236 = vector.shape_cast %235 : vector<1x16x32xbf16> to vector<16x32xbf16>
    %237 = arith.extf %236 : vector<16x32xbf16> to vector<16x32xf32>
    %238 = vector.broadcast %234 : f32 to vector<16x32xf32>
    %239 = arith.mulf %238, %237 : vector<16x32xf32>
    %240 = arith.addf %233, %239 : vector<16x32xf32>
    %c2_156 = arith.constant 2 : index
    %c2_157 = arith.constant 2 : index
    %241 = memref.load %arg1[%c2_156, %c2_157] : memref<4x13xf32, #tpu.memory_space<smem>>
    %c2_158 = arith.constant 2 : index
    %c0_159 = arith.constant 0 : index
    %c0_160 = arith.constant 0 : index
    %242 = vector.load %arg2[%c2_158, %c0_159, %c0_160] : memref<13x16x32xbf16, #tpu.memory_space<vmem>>, vector<1x16x32xbf16>
    %243 = vector.shape_cast %242 : vector<1x16x32xbf16> to vector<16x32xbf16>
    %244 = arith.extf %243 : vector<16x32xbf16> to vector<16x32xf32>
    %245 = vector.broadcast %241 : f32 to vector<16x32xf32>
    %246 = arith.mulf %245, %244 : vector<16x32xf32>
    %247 = arith.addf %240, %246 : vector<16x32xf32>
    %c2_161 = arith.constant 2 : index
    %c3_162 = arith.constant 3 : index
    %248 = memref.load %arg1[%c2_161, %c3_162] : memref<4x13xf32, #tpu.memory_space<smem>>
    %c3_163 = arith.constant 3 : index
    %c0_164 = arith.constant 0 : index
    %c0_165 = arith.constant 0 : index
    %249 = vector.load %arg2[%c3_163, %c0_164, %c0_165] : memref<13x16x32xbf16, #tpu.memory_space<vmem>>, vector<1x16x32xbf16>
    %250 = vector.shape_cast %249 : vector<1x16x32xbf16> to vector<16x32xbf16>
    %251 = arith.extf %250 : vector<16x32xbf16> to vector<16x32xf32>
    %252 = vector.broadcast %248 : f32 to vector<16x32xf32>
    %253 = arith.mulf %252, %251 : vector<16x32xf32>
    %254 = arith.addf %247, %253 : vector<16x32xf32>
    %c2_166 = arith.constant 2 : index
    %c4_167 = arith.constant 4 : index
    %255 = memref.load %arg1[%c2_166, %c4_167] : memref<4x13xf32, #tpu.memory_space<smem>>
    %c4_168 = arith.constant 4 : index
    %c0_169 = arith.constant 0 : index
    %c0_170 = arith.constant 0 : index
    %256 = vector.load %arg2[%c4_168, %c0_169, %c0_170] : memref<13x16x32xbf16, #tpu.memory_space<vmem>>, vector<1x16x32xbf16>
    %257 = vector.shape_cast %256 : vector<1x16x32xbf16> to vector<16x32xbf16>
    %258 = arith.extf %257 : vector<16x32xbf16> to vector<16x32xf32>
    %259 = vector.broadcast %255 : f32 to vector<16x32xf32>
    %260 = arith.mulf %259, %258 : vector<16x32xf32>
    %261 = arith.addf %254, %260 : vector<16x32xf32>
    %c2_171 = arith.constant 2 : index
    %c5_172 = arith.constant 5 : index
    %262 = memref.load %arg1[%c2_171, %c5_172] : memref<4x13xf32, #tpu.memory_space<smem>>
    %c5_173 = arith.constant 5 : index
    %c0_174 = arith.constant 0 : index
    %c0_175 = arith.constant 0 : index
    %263 = vector.load %arg2[%c5_173, %c0_174, %c0_175] : memref<13x16x32xbf16, #tpu.memory_space<vmem>>, vector<1x16x32xbf16>
    %264 = vector.shape_cast %263 : vector<1x16x32xbf16> to vector<16x32xbf16>
    %265 = arith.extf %264 : vector<16x32xbf16> to vector<16x32xf32>
    %266 = vector.broadcast %262 : f32 to vector<16x32xf32>
    %267 = arith.mulf %266, %265 : vector<16x32xf32>
    %268 = arith.addf %261, %267 : vector<16x32xf32>
    %c2_176 = arith.constant 2 : index
    %c6_177 = arith.constant 6 : index
    %269 = memref.load %arg1[%c2_176, %c6_177] : memref<4x13xf32, #tpu.memory_space<smem>>
    %c6_178 = arith.constant 6 : index
    %c0_179 = arith.constant 0 : index
    %c0_180 = arith.constant 0 : index
    %270 = vector.load %arg2[%c6_178, %c0_179, %c0_180] : memref<13x16x32xbf16, #tpu.memory_space<vmem>>, vector<1x16x32xbf16>
    %271 = vector.shape_cast %270 : vector<1x16x32xbf16> to vector<16x32xbf16>
    %272 = arith.extf %271 : vector<16x32xbf16> to vector<16x32xf32>
    %273 = vector.broadcast %269 : f32 to vector<16x32xf32>
    %274 = arith.mulf %273, %272 : vector<16x32xf32>
    %275 = arith.addf %268, %274 : vector<16x32xf32>
    %c2_181 = arith.constant 2 : index
    %c7_182 = arith.constant 7 : index
    %276 = memref.load %arg1[%c2_181, %c7_182] : memref<4x13xf32, #tpu.memory_space<smem>>
    %c7_183 = arith.constant 7 : index
    %c0_184 = arith.constant 0 : index
    %c0_185 = arith.constant 0 : index
    %277 = vector.load %arg2[%c7_183, %c0_184, %c0_185] : memref<13x16x32xbf16, #tpu.memory_space<vmem>>, vector<1x16x32xbf16>
    %278 = vector.shape_cast %277 : vector<1x16x32xbf16> to vector<16x32xbf16>
    %279 = arith.extf %278 : vector<16x32xbf16> to vector<16x32xf32>
    %280 = vector.broadcast %276 : f32 to vector<16x32xf32>
    %281 = arith.mulf %280, %279 : vector<16x32xf32>
    %282 = arith.addf %275, %281 : vector<16x32xf32>
    %c2_186 = arith.constant 2 : index
    %c8_187 = arith.constant 8 : index
    %283 = memref.load %arg1[%c2_186, %c8_187] : memref<4x13xf32, #tpu.memory_space<smem>>
    %c8_188 = arith.constant 8 : index
    %c0_189 = arith.constant 0 : index
    %c0_190 = arith.constant 0 : index
    %284 = vector.load %arg2[%c8_188, %c0_189, %c0_190] : memref<13x16x32xbf16, #tpu.memory_space<vmem>>, vector<1x16x32xbf16>
    %285 = vector.shape_cast %284 : vector<1x16x32xbf16> to vector<16x32xbf16>
    %286 = arith.extf %285 : vector<16x32xbf16> to vector<16x32xf32>
    %287 = vector.broadcast %283 : f32 to vector<16x32xf32>
    %288 = arith.mulf %287, %286 : vector<16x32xf32>
    %289 = arith.addf %282, %288 : vector<16x32xf32>
    %c2_191 = arith.constant 2 : index
    %c9_192 = arith.constant 9 : index
    %290 = memref.load %arg1[%c2_191, %c9_192] : memref<4x13xf32, #tpu.memory_space<smem>>
    %c9_193 = arith.constant 9 : index
    %c0_194 = arith.constant 0 : index
    %c0_195 = arith.constant 0 : index
    %291 = vector.load %arg2[%c9_193, %c0_194, %c0_195] : memref<13x16x32xbf16, #tpu.memory_space<vmem>>, vector<1x16x32xbf16>
    %292 = vector.shape_cast %291 : vector<1x16x32xbf16> to vector<16x32xbf16>
    %293 = arith.extf %292 : vector<16x32xbf16> to vector<16x32xf32>
    %294 = vector.broadcast %290 : f32 to vector<16x32xf32>
    %295 = arith.mulf %294, %293 : vector<16x32xf32>
    %296 = arith.addf %289, %295 : vector<16x32xf32>
    %c2_196 = arith.constant 2 : index
    %c10_197 = arith.constant 10 : index
    %297 = memref.load %arg1[%c2_196, %c10_197] : memref<4x13xf32, #tpu.memory_space<smem>>
    %c10_198 = arith.constant 10 : index
    %c0_199 = arith.constant 0 : index
    %c0_200 = arith.constant 0 : index
    %298 = vector.load %arg2[%c10_198, %c0_199, %c0_200] : memref<13x16x32xbf16, #tpu.memory_space<vmem>>, vector<1x16x32xbf16>
    %299 = vector.shape_cast %298 : vector<1x16x32xbf16> to vector<16x32xbf16>
    %300 = arith.extf %299 : vector<16x32xbf16> to vector<16x32xf32>
    %301 = vector.broadcast %297 : f32 to vector<16x32xf32>
    %302 = arith.mulf %301, %300 : vector<16x32xf32>
    %303 = arith.addf %296, %302 : vector<16x32xf32>
    %c2_201 = arith.constant 2 : index
    %c11_202 = arith.constant 11 : index
    %304 = memref.load %arg1[%c2_201, %c11_202] : memref<4x13xf32, #tpu.memory_space<smem>>
    %c11_203 = arith.constant 11 : index
    %c0_204 = arith.constant 0 : index
    %c0_205 = arith.constant 0 : index
    %305 = vector.load %arg2[%c11_203, %c0_204, %c0_205] : memref<13x16x32xbf16, #tpu.memory_space<vmem>>, vector<1x16x32xbf16>
    %306 = vector.shape_cast %305 : vector<1x16x32xbf16> to vector<16x32xbf16>
    %307 = arith.extf %306 : vector<16x32xbf16> to vector<16x32xf32>
    %308 = vector.broadcast %304 : f32 to vector<16x32xf32>
    %309 = arith.mulf %308, %307 : vector<16x32xf32>
    %310 = arith.addf %303, %309 : vector<16x32xf32>
    %c2_206 = arith.constant 2 : index
    %c12_207 = arith.constant 12 : index
    %311 = memref.load %arg1[%c2_206, %c12_207] : memref<4x13xf32, #tpu.memory_space<smem>>
    %c12_208 = arith.constant 12 : index
    %c0_209 = arith.constant 0 : index
    %c0_210 = arith.constant 0 : index
    %312 = vector.load %arg2[%c12_208, %c0_209, %c0_210] : memref<13x16x32xbf16, #tpu.memory_space<vmem>>, vector<1x16x32xbf16>
    %313 = vector.shape_cast %312 : vector<1x16x32xbf16> to vector<16x32xbf16>
    %314 = arith.extf %313 : vector<16x32xbf16> to vector<16x32xf32>
    %315 = vector.broadcast %311 : f32 to vector<16x32xf32>
    %316 = arith.mulf %315, %314 : vector<16x32xf32>
    %317 = arith.addf %310, %316 : vector<16x32xf32>
    %c2_211 = arith.constant 2 : index
    %c0_212 = arith.constant 0 : index
    %c0_213 = arith.constant 0 : index
    %318 = vector.load %arg3[%c2_211, %c0_212, %c0_213] : memref<3x32x128xf32, #tpu.memory_space<vmem>>, vector<1x32x128xf32>
    %319 = vector.shape_cast %318 : vector<1x32x128xf32> to vector<32x128xf32>
    %cst_214 = arith.constant dense<0.000000e+00> : vector<16x128xf32>
    %320 = tpu.matmul %317, %319, %cst_214 {dimension_numbers = #tpu.dot_dimension_numbers<[1], [0], [0], [1], [0, 0, 1, 1], [], []>} : vector<16x32xf32>, vector<32x128xf32>, vector<16x128xf32> -> vector<16x128xf32>
    %c2_215 = arith.constant 2 : index
    %c0_216 = arith.constant 0 : index
    %c0_217 = arith.constant 0 : index
    %321 = vector.load %arg4[%c2_215, %c0_216, %c0_217] : memref<3x1x128xf32, #tpu.memory_space<vmem>>, vector<1x1x128xf32>
    %322 = vector.shape_cast %321 : vector<1x1x128xf32> to vector<1x128xf32>
    %323 = vector.broadcast %322 : vector<1x128xf32> to vector<16x128xf32>
    %324 = arith.addf %320, %323 : vector<16x128xf32>
    %cst_218 = arith.constant dense<0xFF800000> : vector<16xf32>
    %325 = vector.multi_reduction <maximumf>, %324, %cst_218 [1] : vector<16x128xf32> to vector<16xf32>
    %326 = vector.shape_cast %325 : vector<16xf32> to vector<16x1xf32>
    %327 = vector.broadcast %326 : vector<16x1xf32> to vector<16x128xf32>
    %328 = arith.subf %324, %327 : vector<16x128xf32>
    %329 = math.exp %328 : vector<16x128xf32>
    %cst_219 = arith.constant dense<0.000000e+00> : vector<16xf32>
    %330 = vector.multi_reduction <add>, %329, %cst_219 [1] : vector<16x128xf32> to vector<16xf32>
    %331 = vector.shape_cast %330 : vector<16xf32> to vector<16x1xf32>
    %332 = math.log %331 : vector<16x1xf32>
    %333 = vector.broadcast %332 : vector<16x1xf32> to vector<16x128xf32>
    %334 = arith.subf %328, %333 : vector<16x128xf32>
    %c2_220 = arith.constant 2 : index
    %c0_221 = arith.constant 0 : index
    %c0_222 = arith.constant 0 : index
    %335 = vector.load %arg5[%c2_220, %c0_221, %c0_222] : memref<3x16x128xf32, #tpu.memory_space<vmem>>, vector<1x16x128xf32>
    %336 = vector.shape_cast %335 : vector<1x16x128xf32> to vector<16x128xf32>
    %337 = vector.shape_cast %334 : vector<16x128xf32> to vector<1x16x128xf32>
    tpu.vector_store %arg5[%c2_220, %c0_221, %c0_222], %337 {strides = array<i32>} : memref<3x16x128xf32, #tpu.memory_space<vmem>>, vector<1x16x128xf32>,
    %338 = arith.addf %326, %332 : vector<16x1xf32>
    %c2_223 = arith.constant 2 : index
    %c0_224 = arith.constant 0 : index
    %c0_225 = arith.constant 0 : index
    %339 = vector.load %arg6[%c2_223, %c0_224, %c0_225] : memref<3x16x1xf32, #tpu.memory_space<vmem>>, vector<1x16x1xf32>
    %340 = vector.shape_cast %339 : vector<1x16x1xf32> to vector<16x1xf32>
    %341 = vector.shape_cast %338 : vector<16x1xf32> to vector<1x16x1xf32>
    tpu.vector_store %arg6[%c2_223, %c0_224, %c0_225], %341 {strides = array<i32>} : memref<3x16x1xf32, #tpu.memory_space<vmem>>, vector<1x16x1xf32>,
    %c3_226 = arith.constant 3 : index
    %c0_227 = arith.constant 0 : index
    %342 = memref.load %arg1[%c3_226, %c0_227] : memref<4x13xf32, #tpu.memory_space<smem>>
    %c0_228 = arith.constant 0 : index
    %c0_229 = arith.constant 0 : index
    %c0_230 = arith.constant 0 : index
    %343 = vector.load %arg2[%c0_228, %c0_229, %c0_230] : memref<13x16x32xbf16, #tpu.memory_space<vmem>>, vector<1x16x32xbf16>
    %344 = vector.shape_cast %343 : vector<1x16x32xbf16> to vector<16x32xbf16>
    %345 = arith.extf %344 : vector<16x32xbf16> to vector<16x32xf32>
    %346 = vector.broadcast %342 : f32 to vector<16x32xf32>
    %347 = arith.mulf %346, %345 : vector<16x32xf32>
    %c3_231 = arith.constant 3 : index
    %c1_232 = arith.constant 1 : index
    %348 = memref.load %arg1[%c3_231, %c1_232] : memref<4x13xf32, #tpu.memory_space<smem>>
    %c1_233 = arith.constant 1 : index
    %c0_234 = arith.constant 0 : index
    %c0_235 = arith.constant 0 : index
    %349 = vector.load %arg2[%c1_233, %c0_234, %c0_235] : memref<13x16x32xbf16, #tpu.memory_space<vmem>>, vector<1x16x32xbf16>
    %350 = vector.shape_cast %349 : vector<1x16x32xbf16> to vector<16x32xbf16>
    %351 = arith.extf %350 : vector<16x32xbf16> to vector<16x32xf32>
    %352 = vector.broadcast %348 : f32 to vector<16x32xf32>
    %353 = arith.mulf %352, %351 : vector<16x32xf32>
    %354 = arith.addf %347, %353 : vector<16x32xf32>
    %c3_236 = arith.constant 3 : index
    %c2_237 = arith.constant 2 : index
    %355 = memref.load %arg1[%c3_236, %c2_237] : memref<4x13xf32, #tpu.memory_space<smem>>
    %c2_238 = arith.constant 2 : index
    %c0_239 = arith.constant 0 : index
    %c0_240 = arith.constant 0 : index
    %356 = vector.load %arg2[%c2_238, %c0_239, %c0_240] : memref<13x16x32xbf16, #tpu.memory_space<vmem>>, vector<1x16x32xbf16>
    %357 = vector.shape_cast %356 : vector<1x16x32xbf16> to vector<16x32xbf16>
    %358 = arith.extf %357 : vector<16x32xbf16> to vector<16x32xf32>
    %359 = vector.broadcast %355 : f32 to vector<16x32xf32>
    %360 = arith.mulf %359, %358 : vector<16x32xf32>
    %361 = arith.addf %354, %360 : vector<16x32xf32>
    %c3_241 = arith.constant 3 : index
    %c3_242 = arith.constant 3 : index
    %362 = memref.load %arg1[%c3_241, %c3_242] : memref<4x13xf32, #tpu.memory_space<smem>>
    %c3_243 = arith.constant 3 : index
    %c0_244 = arith.constant 0 : index
    %c0_245 = arith.constant 0 : index
    %363 = vector.load %arg2[%c3_243, %c0_244, %c0_245] : memref<13x16x32xbf16, #tpu.memory_space<vmem>>, vector<1x16x32xbf16>
    %364 = vector.shape_cast %363 : vector<1x16x32xbf16> to vector<16x32xbf16>
    %365 = arith.extf %364 : vector<16x32xbf16> to vector<16x32xf32>
    %366 = vector.broadcast %362 : f32 to vector<16x32xf32>
    %367 = arith.mulf %366, %365 : vector<16x32xf32>
    %368 = arith.addf %361, %367 : vector<16x32xf32>
    %c3_246 = arith.constant 3 : index
    %c4_247 = arith.constant 4 : index
    %369 = memref.load %arg1[%c3_246, %c4_247] : memref<4x13xf32, #tpu.memory_space<smem>>
    %c4_248 = arith.constant 4 : index
    %c0_249 = arith.constant 0 : index
    %c0_250 = arith.constant 0 : index
    %370 = vector.load %arg2[%c4_248, %c0_249, %c0_250] : memref<13x16x32xbf16, #tpu.memory_space<vmem>>, vector<1x16x32xbf16>
    %371 = vector.shape_cast %370 : vector<1x16x32xbf16> to vector<16x32xbf16>
    %372 = arith.extf %371 : vector<16x32xbf16> to vector<16x32xf32>
    %373 = vector.broadcast %369 : f32 to vector<16x32xf32>
    %374 = arith.mulf %373, %372 : vector<16x32xf32>
    %375 = arith.addf %368, %374 : vector<16x32xf32>
    %c3_251 = arith.constant 3 : index
    %c5_252 = arith.constant 5 : index
    %376 = memref.load %arg1[%c3_251, %c5_252] : memref<4x13xf32, #tpu.memory_space<smem>>
    %c5_253 = arith.constant 5 : index
    %c0_254 = arith.constant 0 : index
    %c0_255 = arith.constant 0 : index
    %377 = vector.load %arg2[%c5_253, %c0_254, %c0_255] : memref<13x16x32xbf16, #tpu.memory_space<vmem>>, vector<1x16x32xbf16>
    %378 = vector.shape_cast %377 : vector<1x16x32xbf16> to vector<16x32xbf16>
    %379 = arith.extf %378 : vector<16x32xbf16> to vector<16x32xf32>
    %380 = vector.broadcast %376 : f32 to vector<16x32xf32>
    %381 = arith.mulf %380, %379 : vector<16x32xf32>
    %382 = arith.addf %375, %381 : vector<16x32xf32>
    %c3_256 = arith.constant 3 : index
    %c6_257 = arith.constant 6 : index
    %383 = memref.load %arg1[%c3_256, %c6_257] : memref<4x13xf32, #tpu.memory_space<smem>>
    %c6_258 = arith.constant 6 : index
    %c0_259 = arith.constant 0 : index
    %c0_260 = arith.constant 0 : index
    %384 = vector.load %arg2[%c6_258, %c0_259, %c0_260] : memref<13x16x32xbf16, #tpu.memory_space<vmem>>, vector<1x16x32xbf16>
    %385 = vector.shape_cast %384 : vector<1x16x32xbf16> to vector<16x32xbf16>
    %386 = arith.extf %385 : vector<16x32xbf16> to vector<16x32xf32>
    %387 = vector.broadcast %383 : f32 to vector<16x32xf32>
    %388 = arith.mulf %387, %386 : vector<16x32xf32>
    %389 = arith.addf %382, %388 : vector<16x32xf32>
    %c3_261 = arith.constant 3 : index
    %c7_262 = arith.constant 7 : index
    %390 = memref.load %arg1[%c3_261, %c7_262] : memref<4x13xf32, #tpu.memory_space<smem>>
    %c7_263 = arith.constant 7 : index
    %c0_264 = arith.constant 0 : index
    %c0_265 = arith.constant 0 : index
    %391 = vector.load %arg2[%c7_263, %c0_264, %c0_265] : memref<13x16x32xbf16, #tpu.memory_space<vmem>>, vector<1x16x32xbf16>
    %392 = vector.shape_cast %391 : vector<1x16x32xbf16> to vector<16x32xbf16>
    %393 = arith.extf %392 : vector<16x32xbf16> to vector<16x32xf32>
    %394 = vector.broadcast %390 : f32 to vector<16x32xf32>
    %395 = arith.mulf %394, %393 : vector<16x32xf32>
    %396 = arith.addf %389, %395 : vector<16x32xf32>
    %c3_266 = arith.constant 3 : index
    %c8_267 = arith.constant 8 : index
    %397 = memref.load %arg1[%c3_266, %c8_267] : memref<4x13xf32, #tpu.memory_space<smem>>
    %c8_268 = arith.constant 8 : index
    %c0_269 = arith.constant 0 : index
    %c0_270 = arith.constant 0 : index
    %398 = vector.load %arg2[%c8_268, %c0_269, %c0_270] : memref<13x16x32xbf16, #tpu.memory_space<vmem>>, vector<1x16x32xbf16>
    %399 = vector.shape_cast %398 : vector<1x16x32xbf16> to vector<16x32xbf16>
    %400 = arith.extf %399 : vector<16x32xbf16> to vector<16x32xf32>
    %401 = vector.broadcast %397 : f32 to vector<16x32xf32>
    %402 = arith.mulf %401, %400 : vector<16x32xf32>
    %403 = arith.addf %396, %402 : vector<16x32xf32>
    %c3_271 = arith.constant 3 : index
    %c9_272 = arith.constant 9 : index
    %404 = memref.load %arg1[%c3_271, %c9_272] : memref<4x13xf32, #tpu.memory_space<smem>>
    %c9_273 = arith.constant 9 : index
    %c0_274 = arith.constant 0 : index
    %c0_275 = arith.constant 0 : index
    %405 = vector.load %arg2[%c9_273, %c0_274, %c0_275] : memref<13x16x32xbf16, #tpu.memory_space<vmem>>, vector<1x16x32xbf16>
    %406 = vector.shape_cast %405 : vector<1x16x32xbf16> to vector<16x32xbf16>
    %407 = arith.extf %406 : vector<16x32xbf16> to vector<16x32xf32>
    %408 = vector.broadcast %404 : f32 to vector<16x32xf32>
    %409 = arith.mulf %408, %407 : vector<16x32xf32>
    %410 = arith.addf %403, %409 : vector<16x32xf32>
    %c3_276 = arith.constant 3 : index
    %c10_277 = arith.constant 10 : index
    %411 = memref.load %arg1[%c3_276, %c10_277] : memref<4x13xf32, #tpu.memory_space<smem>>
    %c10_278 = arith.constant 10 : index
    %c0_279 = arith.constant 0 : index
    %c0_280 = arith.constant 0 : index
    %412 = vector.load %arg2[%c10_278, %c0_279, %c0_280] : memref<13x16x32xbf16, #tpu.memory_space<vmem>>, vector<1x16x32xbf16>
    %413 = vector.shape_cast %412 : vector<1x16x32xbf16> to vector<16x32xbf16>
    %414 = arith.extf %413 : vector<16x32xbf16> to vector<16x32xf32>
    %415 = vector.broadcast %411 : f32 to vector<16x32xf32>
    %416 = arith.mulf %415, %414 : vector<16x32xf32>
    %417 = arith.addf %410, %416 : vector<16x32xf32>
    %c3_281 = arith.constant 3 : index
    %c11_282 = arith.constant 11 : index
    %418 = memref.load %arg1[%c3_281, %c11_282] : memref<4x13xf32, #tpu.memory_space<smem>>
    %c11_283 = arith.constant 11 : index
    %c0_284 = arith.constant 0 : index
    %c0_285 = arith.constant 0 : index
    %419 = vector.load %arg2[%c11_283, %c0_284, %c0_285] : memref<13x16x32xbf16, #tpu.memory_space<vmem>>, vector<1x16x32xbf16>
    %420 = vector.shape_cast %419 : vector<1x16x32xbf16> to vector<16x32xbf16>
    %421 = arith.extf %420 : vector<16x32xbf16> to vector<16x32xf32>
    %422 = vector.broadcast %418 : f32 to vector<16x32xf32>
    %423 = arith.mulf %422, %421 : vector<16x32xf32>
    %424 = arith.addf %417, %423 : vector<16x32xf32>
    %c3_286 = arith.constant 3 : index
    %c12_287 = arith.constant 12 : index
    %425 = memref.load %arg1[%c3_286, %c12_287] : memref<4x13xf32, #tpu.memory_space<smem>>
    %c12_288 = arith.constant 12 : index
    %c0_289 = arith.constant 0 : index
    %c0_290 = arith.constant 0 : index
    %426 = vector.load %arg2[%c12_288, %c0_289, %c0_290] : memref<13x16x32xbf16, #tpu.memory_space<vmem>>, vector<1x16x32xbf16>
    %427 = vector.shape_cast %426 : vector<1x16x32xbf16> to vector<16x32xbf16>
    %428 = arith.extf %427 : vector<16x32xbf16> to vector<16x32xf32>
    %429 = vector.broadcast %425 : f32 to vector<16x32xf32>
    %430 = arith.mulf %429, %428 : vector<16x32xf32>
    %431 = arith.addf %424, %430 : vector<16x32xf32>
    %c0_291 = arith.constant 0 : index
    %c0_292 = arith.constant 0 : index
    %432 = vector.load %arg7[%c0_291, %c0_292] : memref<16x32xf32, #tpu.memory_space<vmem>>, vector<16x32xf32>
    tpu.vector_store %arg7[%c0_291, %c0_292], %431 {strides = array<i32>} : memref<16x32xf32, #tpu.memory_space<vmem>>, vector<16x32xf32>,
    return
  }
  func.func @transform_0(%arg0: i32) -> (i32, i32) {
    %c0_i32 = arith.constant 0 : i32
    %c0_i32_0 = arith.constant 0 : i32
    %c0_i32_1 = arith.constant 0 : i32
    return %c0_i32, %c0_i32_0 : i32, i32
  }
  func.func @transform_1(%arg0: i32) -> (i32, i32, i32) {
    %c0_i32 = arith.constant 0 : i32
    %c0_i32_0 = arith.constant 0 : i32
    %c0_i32_1 = arith.constant 0 : i32
    return %c0_i32, %arg0, %c0_i32_0 : i32, i32, i32
  }
  func.func @transform_2(%arg0: i32) -> (i32, i32, i32) {
    %c0_i32 = arith.constant 0 : i32
    %c0_i32_0 = arith.constant 0 : i32
    %c0_i32_1 = arith.constant 0 : i32
    %c0_i32_2 = arith.constant 0 : i32
    return %c0_i32, %c0_i32_0, %c0_i32_1 : i32, i32, i32
  }
  func.func @transform_3(%arg0: i32) -> (i32, i32, i32) {
    %c0_i32 = arith.constant 0 : i32
    %c0_i32_0 = arith.constant 0 : i32
    %c0_i32_1 = arith.constant 0 : i32
    %c0_i32_2 = arith.constant 0 : i32
    return %c0_i32, %c0_i32_0, %c0_i32_1 : i32, i32, i32
  }
  func.func @transform_4(%arg0: i32) -> (i32, i32, i32) {
    %c0_i32 = arith.constant 0 : i32
    %c0_i32_0 = arith.constant 0 : i32
    %c0_i32_1 = arith.constant 0 : i32
    return %c0_i32, %arg0, %c0_i32_0 : i32, i32, i32
  }
  func.func @transform_5(%arg0: i32) -> (i32, i32, i32) {
    %c0_i32 = arith.constant 0 : i32
    %c0_i32_0 = arith.constant 0 : i32
    %c0_i32_1 = arith.constant 0 : i32
    return %c0_i32, %arg0, %c0_i32_0 : i32, i32, i32
  }
  func.func @transform_6(%arg0: i32) -> (i32, i32) {
    %c0_i32 = arith.constant 0 : i32
    %c0_i32_0 = arith.constant 0 : i32
    return %arg0, %c0_i32 : i32, i32
  }
}

</mosaic_0001>

<llo_original>
// kernel: tpu_custom_call.1
$region0: #{tpu_custom_call.1}
  #allocation0 [shape = 'u32[]', space=smem, size = 0x4, offset = 0x4, fixed_abs, tag = 'smem constant byte address 0x4 - core index']
  #allocation1 [shape = 'u32[144,128]{1,0:T(1,128)}', space=vmem, size = 0x12000, scoped, tag = 'internal scratch']
  #allocation8 [shape = 's32[]', space=sflag, size = 0x4, offset = 0, fixed_abs, tag = 'sflag constant byte address 0x0 - dummy sync flag']
  %s0 = inlined_call_operand.vmem [shape: f32[4,13], index: 0, kind: input, shape index: {}]
  %s1 = inlined_call_operand.vmem [shape: bf16[13,64,32], index: 1, kind: input, shape index: {}]
  %s2 = inlined_call_operand.vmem [shape: f32[3,32,128], index: 2, kind: input, shape index: {}]
  %s3 = inlined_call_operand.vmem [shape: f32[3,1,128], index: 3, kind: input, shape index: {}]
  %s4 = inlined_call_operand.hbm [shape: f32[3,64,128], index: 4, kind: output, shape index: {0}]
  %s5 = inlined_call_operand.vmem [shape: f32[3,64,1], index: 5, kind: output, shape index: {1}]
  %s6 = inlined_call_operand.vmem [shape: f32[64,32], index: 6, kind: output, shape index: {2}]
  %7 = xla_tuple %s4, %s5, %s6
  %s8 = sld [smem:[#allocation0]]
  $region144: #{tpu_custom_call.1} parent=0
    _
  %s10 = ssub.s32 1, %s8
  %s11 = scalar_select 0, %s10, %s8
  $region1: #{tpu_custom_call.1} parent=0
    #allocation2 [shape = 'u8[2048]{0}', space=smem, size = 0x800, scoped, tag = 'input window, operand 0, single buffered']
    #allocation3 [shape = 's32[2]{0}', space=sflag, size = 0x8, scoped, tag = 'scoped memory for tpu_custom_call.1']
    #allocation4 [shape = 's32[2]{0}', space=sflag, size = 0x8, scoped, tag = 'scoped memory for tpu_custom_call.1']
    #allocation5 [shape = 'u8[106496]{0}', space=vmem, size = 0x1a000, scoped, tag = 'input window, operand 1']
    #allocation6 [shape = 'u8[49152]{0}', space=vmem, size = 0xc000, scoped, tag = 'output window, operand 0']
    #allocation7 [shape = 'u8[49152]{0}', space=vmem, size = 0xc000, scoped, tag = 'output window, operand 1']
    %12 = vsyncpa [#allocation4], 0
    %13 = vsyncpa [#allocation3], 0
    %s14 = scalar_lea.sflag [#allocation3], 1
    %15 = vsyncpa %s14, 0
    loop: start=0, step=1, limit=6
    $region2: #{tpu_custom_call.1} parent=1 // loop_pre_header
      _
    $region3: #{tpu_custom_call.1} parent=1 // loop_header
      %s17 = sphi 0, %s21
      %p18 = scmp.ge.s32.totalorder %s17, 6
      %s25 = sphi 0, %s25
      %s27 = sphi 0, %s25
      %s28 = sphi 0, %s27
      %s42 = sphi 0, %s28
      %s48 = sphi 0, %s50
      %s51 = sphi 0, %s48
      %s52 = sphi 0, %s51
      %s68 = sphi 0, %s52
      %s72 = sphi 0, %s72
      %s74 = sphi 0, %s72
      %s75 = sphi 0, %s74
      %s89 = sphi 0, %s75
      %s93 = sphi 0, %s93
      %s95 = sphi 0, %s93
      %s96 = sphi 0, %s95
      %s110 = sphi 0, %s96
      %s116 = sphi 0, %s118
      %s119 = sphi 0, %s116
      %s120 = sphi 0, %s119
      %s136 = sphi 0, %s120
      %s142 = sphi 0, %s144
      %s145 = sphi 0, %s142
      %s146 = sphi 0, %s145
      %s162 = sphi 0, %s146
      %s168 = sphi 0, %s170
      %s171 = sphi 0, %s168
      %s172 = sphi 0, %s171
      %s188 = sphi 0, %s172
    $region4: #{tpu_custom_call.1} parent=1 // loop_header_branch
      %20 = sbr.rel (%p18) target = $region8
    $region5: #{tpu_custom_call.1} parent=1 // loop_body
      %s22 = ssub.s32 %s17, 1
      %s23 = ssub.s32 %s17, 2
      %s24 = sadd.s32 %s17, 1
      %s26 = sadd.s32 %s25, 1
      %p29 = scmp.eq.s32.totalorder %s17, 3
      %p30 = scmp.ne.s32.totalorder %s25, %s27
      %p31 = scmp.eq.s32.totalorder %s17, 0
      %p32 = por %p30, %p31
      %p33 = scmp.ne.s32.totalorder %s25, %s27
      %p34 = scmp.eq.s32.totalorder %s22, 3
      %p35 = por %p33, %p34
      %p36 = scmp.ne.s32.totalorder %s27, %s28
      %p37 = scmp.eq.s32.totalorder %s22, 0
      %p38 = por %p36, %p37
      %p39 = scmp.ne.s32.totalorder %s27, %s28
      %p40 = scmp.eq.s32.totalorder %s23, 3
      %p41 = por %p39, %p40
      %p43 = scmp.ne.s32.totalorder %s28, %s42
      %p44 = scmp.eq.s32.totalorder %s23, 0
      %p45 = por %p43, %p44
      %s46 = ssub.s32 %s17, %s24
      %p47 = scmp.eq.s32.totalorder %s46, 0
      %s49 = sadd.s32 %s48, 1
      %s50 = scalar_select %p47, %s48, %s49
      %p53 = pneg %p47
      %p54 = scmp.eq.s32.totalorder %s17, 3
      %p55 = por %p53, %p54
      %p56 = scmp.ne.s32.totalorder %s48, %s51
      %p57 = scmp.eq.s32.totalorder %s17, 0
      %p58 = por %p56, %p57
      %p59 = scmp.ne.s32.totalorder %s48, %s51
      %p60 = scmp.eq.s32.totalorder %s22, 3
      %p61 = por %p59, %p60
      %p62 = scmp.ne.s32.totalorder %s51, %s52
      %p63 = scmp.eq.s32.totalorder %s22, 0
      %p64 = por %p62, %p63
      %p65 = scmp.ne.s32.totalorder %s51, %s52
      %p66 = scmp.eq.s32.totalorder %s23, 3
      %p67 = por %p65, %p66
      %p69 = scmp.ne.s32.totalorder %s52, %s68
      %p70 = scmp.eq.s32.totalorder %s23, 0
      %p71 = por %p69, %p70
      %s73 = sadd.s32 %s72, 1
      %p76 = scmp.eq.s32.totalorder %s17, 3
      %p77 = scmp.ne.s32.totalorder %s72, %s74
      %p78 = scmp.eq.s32.totalorder %s17, 0
      %p79 = por %p77, %p78
      %p80 = scmp.ne.s32.totalorder %s72, %s74
      %p81 = scmp.eq.s32.totalorder %s22, 3
      %p82 = por %p80, %p81
      %p83 = scmp.ne.s32.totalorder %s74, %s75
      %p84 = scmp.eq.s32.totalorder %s22, 0
      %p85 = por %p83, %p84
      %p86 = scmp.ne.s32.totalorder %s74, %s75
      %p87 = scmp.eq.s32.totalorder %s23, 3
      %p88 = por %p86, %p87
      %p90 = scmp.ne.s32.totalorder %s75, %s89
      %p91 = scmp.eq.s32.totalorder %s23, 0
      %p92 = por %p90, %p91
      %s94 = sadd.s32 %s93, 1
      %p97 = scmp.eq.s32.totalorder %s17, 3
      %p98 = scmp.ne.s32.totalorder %s93, %s95
      %p99 = scmp.eq.s32.totalorder %s17, 0
      %p100 = por %p98, %p99
      %p101 = scmp.ne.s32.totalorder %s93, %s95
      %p102 = scmp.eq.s32.totalorder %s22, 3
      %p103 = por %p101, %p102
      %p104 = scmp.ne.s32.totalorder %s95, %s96
      %p105 = scmp.eq.s32.totalorder %s22, 0
      %p106 = por %p104, %p105
      %p107 = scmp.ne.s32.totalorder %s95, %s96
      %p108 = scmp.eq.s32.totalorder %s23, 3
      %p109 = por %p107, %p108
      %p111 = scmp.ne.s32.totalorder %s96, %s110
      %p112 = scmp.eq.s32.totalorder %s23, 0
      %p113 = por %p111, %p112
      %s114 = ssub.s32 %s17, %s24
      %p115 = scmp.eq.s32.totalorder %s114, 0
      %s117 = sadd.s32 %s116, 1
      %s118 = scalar_select %p115, %s116, %s117
      %p121 = pneg %p115
      %p122 = scmp.eq.s32.totalorder %s17, 3
      %p123 = por %p121, %p122
      %p124 = scmp.ne.s32.totalorder %s116, %s119
      %p125 = scmp.eq.s32.totalorder %s17, 0
      %p126 = por %p124, %p125
      %p127 = scmp.ne.s32.totalorder %s116, %s119
      %p128 = scmp.eq.s32.totalorder %s22, 3
      %p129 = por %p127, %p128
      %p130 = scmp.ne.s32.totalorder %s119, %s120
      %p131 = scmp.eq.s32.totalorder %s22, 0
      %p132 = por %p130, %p131
      %p133 = scmp.ne.s32.totalorder %s119, %s120
      %p134 = scmp.eq.s32.totalorder %s23, 3
      %p135 = por %p133, %p134
      %p137 = scmp.ne.s32.totalorder %s120, %s136
      %p138 = scmp.eq.s32.totalorder %s23, 0
      %p139 = por %p137, %p138
      %s140 = ssub.s32 %s17, %s24
      %p141 = scmp.eq.s32.totalorder %s140, 0
      %s143 = sadd.s32 %s142, 1
      %s144 = scalar_select %p141, %s142, %s143
      %p147 = pneg %p141
      %p148 = scmp.eq.s32.totalorder %s17, 3
      %p149 = por %p147, %p148
      %p150 = scmp.ne.s32.totalorder %s142, %s145
      %p151 = scmp.eq.s32.totalorder %s17, 0
      %p152 = por %p150, %p151
      %p153 = scmp.ne.s32.totalorder %s142, %s145
      %p154 = scmp.eq.s32.totalorder %s22, 3
      %p155 = por %p153, %p154
      %p156 = scmp.ne.s32.totalorder %s145, %s146
      %p157 = scmp.eq.s32.totalorder %s22, 0
      %p158 = por %p156, %p157
      %p159 = scmp.ne.s32.totalorder %s145, %s146
      %p160 = scmp.eq.s32.totalorder %s23, 3
      %p161 = por %p159, %p160
      %p163 = scmp.ne.s32.totalorder %s146, %s162
      %p164 = scmp.eq.s32.totalorder %s23, 0
      %p165 = por %p163, %p164
      %s166 = ssub.s32 %s17, %s24
      %p167 = scmp.eq.s32.totalorder %s166, 0
      %s169 = sadd.s32 %s168, 1
      %s170 = scalar_select %p167, %s168, %s169
      %p173 = pneg %p167
      %p174 = scmp.eq.s32.totalorder %s17, 3
      %p175 = por %p173, %p174
      %p176 = scmp.ne.s32.totalorder %s168, %s171
      %p177 = scmp.eq.s32.totalorder %s17, 0
      %p178 = por %p176, %p177
      %p179 = scmp.ne.s32.totalorder %s168, %s171
      %p180 = scmp.eq.s32.totalorder %s22, 3
      %p181 = por %p179, %p180
      %p182 = scmp.ne.s32.totalorder %s171, %s172
      %p183 = scmp.eq.s32.totalorder %s22, 0
      %p184 = por %p182, %p183
      %p185 = scmp.ne.s32.totalorder %s171, %s172
      %p186 = scmp.eq.s32.totalorder %s23, 3
      %p187 = por %p185, %p186
      %p189 = scmp.ne.s32.totalorder %s172, %s188
      %p190 = scmp.eq.s32.totalorder %s23, 0
      %p191 = por %p189, %p190
      %p192 = scmp.le.s32.totalorder 1, %s17
      %p193 = scmp.lt.s32.totalorder %s17, 5
      %p194 = pnand %p192, %p193
      %p195 = pneg %p194
      // Predicated region
      $region9: #{tpu_custom_call.1} parent=5 // pred_check
        _
      $region10: #{tpu_custom_call.1} parent=5 // pred_check_branch
        %197 = sbr.rel (%p194) target = $region12
      $region11: #{tpu_custom_call.1} parent=5 // pred_region
        %s198 = ssub.s32 %s17, 1
        // Predicated region
        $region13: #{tpu_custom_call.1} parent=11 // pred_check
          %p199 = pneg %p38
        $region14: #{tpu_custom_call.1} parent=11 // pred_check_branch
          %201 = sbr.rel (%p199) target = $region16
        $region15: #{tpu_custom_call.1} parent=11 // pred_region
          %s203 = ssub.s32 64, 64
          %204 = vsyncadd [#allocation4], %s203
          %s206 = sshll.u32 %s0, 4
          %s207 = int_to_ptr.vmem [resolvable:$true] %s206
          %209 = dma.vmem_to_smem %s207, 64, [#allocation2], [#allocation4]
        $region16: #{tpu_custom_call.1} parent=11 // pred_fallthru
          _
        // Predicated region
        $region17: #{tpu_custom_call.1} parent=11 // pred_check
          %p210 = pneg %p85
        $region18: #{tpu_custom_call.1} parent=11 // pred_check_branch
          %212 = sbr.rel (%p210) target = $region20
        $region19: #{tpu_custom_call.1} parent=11 // pred_region
          _
        $region20: #{tpu_custom_call.1} parent=11 // pred_fallthru
          _
        // Predicated region
        $region21: #{tpu_custom_call.1} parent=11 // pred_check
          %p213 = pneg %p106
        $region22: #{tpu_custom_call.1} parent=11 // pred_check_branch
          %215 = sbr.rel (%p213) target = $region24
        $region23: #{tpu_custom_call.1} parent=11 // pred_region
          _
        $region24: #{tpu_custom_call.1} parent=11 // pred_fallthru
          _
      $region12: #{tpu_custom_call.1} parent=5 // pred_fallthru
        _
      %p216 = scmp.lt.s32.totalorder %s17, 4
      // Predicated region
      $region25: #{tpu_custom_call.1} parent=5 // pred_check
        %p217 = pneg %p216
      $region26: #{tpu_custom_call.1} parent=5 // pred_check_branch
        %219 = sbr.rel (%p217) target = $region28
      $region27: #{tpu_custom_call.1} parent=5 // pred_region
        // Predicated region
        $region29: #{tpu_custom_call.1} parent=27 // pred_check
          %p220 = pneg %p58
        $region30: #{tpu_custom_call.1} parent=27 // pred_check_branch
          %222 = sbr.rel (%p220) target = $region32
        $region31: #{tpu_custom_call.1} parent=27 // pred_region
          %s223 = sand.u32 %s48, 1
          %s224 = sand.u32 %s48, 1
          %s225 = smul.addr %s224, 104
          %s226 = scalar_lea.vmem [#allocation5], %s225
          %s227 = smul.u32 2, %s17
          %s228 = smul.addr %s227, 4
          %s229 = scalar_lea.vmem %s1, %s228
          // Predicated region
          $region33: #{tpu_custom_call.1} parent=31 // pred_check
            _
          $region34: #{tpu_custom_call.1} parent=31 // pred_check_branch
            %231 = sbr.rel (0) target = $region36
          $region35: #{tpu_custom_call.1} parent=31 // pred_region
            // Predicated region
            $region37: #{tpu_custom_call.1} parent=35 // pred_check
              _
            $region38: #{tpu_custom_call.1} parent=35 // pred_check_branch
              %233 = sbr.rel target = $region40
            $region39: #{tpu_custom_call.1} parent=35 // pred_region
              // Predicated region
              $region52: #{tpu_custom_call.1} parent=39 // pred_check
                _
              $region53: #{tpu_custom_call.1} parent=39 // pred_check_branch
                %299 = sbr.rel (0) target = $region55
              $region54: #{tpu_custom_call.1} parent=39 // pred_region
                loop: start=0, step=1, limit=1
                $region56: #{tpu_custom_call.1} parent=54 // loop_pre_header
                  _
                $region57: #{tpu_custom_call.1} parent=54 // loop_header
                  %s301 = sphi 0, %s305
                  %p302 = scmp.ge.s32.totalorder %s301, 1
                  %s306 = sphi %s229, %s229
                  %s307 = sphi %s226, %s226
                $region58: #{tpu_custom_call.1} parent=54 // loop_header_branch
                  %304 = sbr.rel (%p302) target = $region62
                $region59: #{tpu_custom_call.1} parent=54 // loop_body
                  _
                $region60: #{tpu_custom_call.1} parent=54 // loop_footer
                  %s305 = sadd.s32 1, %s301
                $region61: #{tpu_custom_call.1} parent=54 // loop_footer_branch
                  %300 = sbr.rel target = $region57
                $region62: #{tpu_custom_call.1} parent=54 // loop_exit
                  _
                %s309 = ssub.s32 16, 1
                loop: start=0, step=1, limit=1
                $region63: #{tpu_custom_call.1} parent=54 // loop_pre_header
                  _
                $region64: #{tpu_custom_call.1} parent=54 // loop_header
                  %s311 = sphi 0, %s315
                  %p312 = scmp.ge.s32.totalorder %s311, 1
                  %s316 = sphi %s229, %s229
                  %s317 = sphi %s226, %s226
                $region65: #{tpu_custom_call.1} parent=54 // loop_header_branch
                  %314 = sbr.rel (%p312) target = $region69
                $region66: #{tpu_custom_call.1} parent=54 // loop_body
                  %v318 = vld [vmem:[%s316] sm:%s309]
                  %319 = vst [vmem:[%s317] sm:%s309] %v318
                  %v320 = vld [vmem:[%s316 + $0x4] sm:%s309]
                  %321 = vst [vmem:[%s317 + $0x4] sm:%s309] %v320
                  %v322 = vld [vmem:[%s316 + $0x20] sm:%s309]
                  %323 = vst [vmem:[%s317 + $0x8] sm:%s309] %v322
                  %v324 = vld [vmem:[%s316 + $0x24] sm:%s309]
                  %325 = vst [vmem:[%s317 + $0xc] sm:%s309] %v324
                  %v326 = vld [vmem:[%s316 + $0x40] sm:%s309]
                  %327 = vst [vmem:[%s317 + $0x10] sm:%s309] %v326
                  %v328 = vld [vmem:[%s316 + $0x44] sm:%s309]
                  %329 = vst [vmem:[%s317 + $0x14] sm:%s309] %v328
                  %v330 = vld [vmem:[%s316 + $0x60] sm:%s309]
                  %331 = vst [vmem:[%s317 + $0x18] sm:%s309] %v330
                  %v332 = vld [vmem:[%s316 + $0x64] sm:%s309]
                  %333 = vst [vmem:[%s317 + $0x1c] sm:%s309] %v332
                  %v334 = vld [vmem:[%s316 + $0x80] sm:%s309]
                  %335 = vst [vmem:[%s317 + $0x20] sm:%s309] %v334
                  %v336 = vld [vmem:[%s316 + $0x84] sm:%s309]
                  %337 = vst [vmem:[%s317 + $0x24] sm:%s309] %v336
                  %v338 = vld [vmem:[%s316 + $0xa0] sm:%s309]
                  %339 = vst [vmem:[%s317 + $0x28] sm:%s309] %v338
                  %v340 = vld [vmem:[%s316 + $0xa4] sm:%s309]
                  %341 = vst [vmem:[%s317 + $0x2c] sm:%s309] %v340
                  %v342 = vld [vmem:[%s316 + $0xc0] sm:%s309]
                  %343 = vst [vmem:[%s317 + $0x30] sm:%s309] %v342
                  %v344 = vld [vmem:[%s316 + $0xc4] sm:%s309]
                  %345 = vst [vmem:[%s317 + $0x34] sm:%s309] %v344
                  %v346 = vld [vmem:[%s316 + $0xe0] sm:%s309]
                  %347 = vst [vmem:[%s317 + $0x38] sm:%s309] %v346
                  %v348 = vld [vmem:[%s316 + $0xe4] sm:%s309]
                  %349 = vst [vmem:[%s317 + $0x3c] sm:%s309] %v348
                  %v350 = vld [vmem:[%s316 + $0x100] sm:%s309]
                  %351 = vst [vmem:[%s317 + $0x40] sm:%s309] %v350
                  %v352 = vld [vmem:[%s316 + $0x104] sm:%s309]
                  %353 = vst [vmem:[%s317 + $0x44] sm:%s309] %v352
                  %v354 = vld [vmem:[%s316 + $0x120] sm:%s309]
                  %355 = vst [vmem:[%s317 + $0x48] sm:%s309] %v354
                  %v356 = vld [vmem:[%s316 + $0x124] sm:%s309]
                  %357 = vst [vmem:[%s317 + $0x4c] sm:%s309] %v356
                  %v358 = vld [vmem:[%s316 + $0x140] sm:%s309]
                  %359 = vst [vmem:[%s317 + $0x50] sm:%s309] %v358
                  %v360 = vld [vmem:[%s316 + $0x144] sm:%s309]
                  %361 = vst [vmem:[%s317 + $0x54] sm:%s309] %v360
                  %v362 = vld [vmem:[%s316 + $0x160] sm:%s309]
                  %363 = vst [vmem:[%s317 + $0x58] sm:%s309] %v362
                  %v364 = vld [vmem:[%s316 + $0x164] sm:%s309]
                  %365 = vst [vmem:[%s317 + $0x5c] sm:%s309] %v364
                  %v366 = vld [vmem:[%s316 + $0x180] sm:%s309]
                  %367 = vst [vmem:[%s317 + $0x60] sm:%s309] %v366
                  %v368 = vld [vmem:[%s316 + $0x184] sm:%s309]
                  %369 = vst [vmem:[%s317 + $0x64] sm:%s309] %v368
                $region67: #{tpu_custom_call.1} parent=54 // loop_footer
                  %s315 = sadd.s32 1, %s311
                $region68: #{tpu_custom_call.1} parent=54 // loop_footer_branch
                  %310 = sbr.rel target = $region64
                $region69: #{tpu_custom_call.1} parent=54 // loop_exit
                  _
              $region55: #{tpu_custom_call.1} parent=39 // pred_fallthru
                _
            $region40: #{tpu_custom_call.1} parent=35 // pred_fallthru
              _
            // Predicated region
            $region41: #{tpu_custom_call.1} parent=35 // pred_check
              _
            $region42: #{tpu_custom_call.1} parent=35 // pred_check_branch
              %235 = sbr.rel (0) target = $region44
            $region43: #{tpu_custom_call.1} parent=35 // pred_region
              %s237 = ssub.s32 16, 1
              loop: start=0, step=1, limit=1
              $region45: #{tpu_custom_call.1} parent=43 // loop_pre_header
                _
              $region46: #{tpu_custom_call.1} parent=43 // loop_header
                %s239 = sphi 0, %s243
                %p240 = scmp.ge.s32.totalorder %s239, 1
                %s244 = sphi %s229, %s229
                %s245 = sphi %s226, %s226
              $region47: #{tpu_custom_call.1} parent=43 // loop_header_branch
                %242 = sbr.rel (%p240) target = $region51
              $region48: #{tpu_custom_call.1} parent=43 // loop_body
                %v246 = vld [vmem:[%s244] sm:%s237]
                %247 = vst [vmem:[%s245] sm:%s237] %v246
                %v248 = vld [vmem:[%s244 + $0x4] sm:%s237]
                %249 = vst [vmem:[%s245 + $0x4] sm:%s237] %v248
                %v250 = vld [vmem:[%s244 + $0x20] sm:%s237]
                %251 = vst [vmem:[%s245 + $0x8] sm:%s237] %v250
                %v252 = vld [vmem:[%s244 + $0x24] sm:%s237]
                %253 = vst [vmem:[%s245 + $0xc] sm:%s237] %v252
                %v254 = vld [vmem:[%s244 + $0x40] sm:%s237]
                %255 = vst [vmem:[%s245 + $0x10] sm:%s237] %v254
                %v256 = vld [vmem:[%s244 + $0x44] sm:%s237]
                %257 = vst [vmem:[%s245 + $0x14] sm:%s237] %v256
                %v258 = vld [vmem:[%s244 + $0x60] sm:%s237]
                %259 = vst [vmem:[%s245 + $0x18] sm:%s237] %v258
                %v260 = vld [vmem:[%s244 + $0x64] sm:%s237]
                %261 = vst [vmem:[%s245 + $0x1c] sm:%s237] %v260
                %v262 = vld [vmem:[%s244 + $0x80] sm:%s237]
                %263 = vst [vmem:[%s245 + $0x20] sm:%s237] %v262
                %v264 = vld [vmem:[%s244 + $0x84] sm:%s237]
                %265 = vst [vmem:[%s245 + $0x24] sm:%s237] %v264
                %v266 = vld [vmem:[%s244 + $0xa0] sm:%s237]
                %267 = vst [vmem:[%s245 + $0x28] sm:%s237] %v266
                %v268 = vld [vmem:[%s244 + $0xa4] sm:%s237]
                %269 = vst [vmem:[%s245 + $0x2c] sm:%s237] %v268
                %v270 = vld [vmem:[%s244 + $0xc0] sm:%s237]
                %271 = vst [vmem:[%s245 + $0x30] sm:%s237] %v270
                %v272 = vld [vmem:[%s244 + $0xc4] sm:%s237]
                %273 = vst [vmem:[%s245 + $0x34] sm:%s237] %v272
                %v274 = vld [vmem:[%s244 + $0xe0] sm:%s237]
                %275 = vst [vmem:[%s245 + $0x38] sm:%s237] %v274
                %v276 = vld [vmem:[%s244 + $0xe4] sm:%s237]
                %277 = vst [vmem:[%s245 + $0x3c] sm:%s237] %v276
                %v278 = vld [vmem:[%s244 + $0x100] sm:%s237]
                %279 = vst [vmem:[%s245 + $0x40] sm:%s237] %v278
                %v280 = vld [vmem:[%s244 + $0x104] sm:%s237]
                %281 = vst [vmem:[%s245 + $0x44] sm:%s237] %v280
                %v282 = vld [vmem:[%s244 + $0x120] sm:%s237]
                %283 = vst [vmem:[%s245 + $0x48] sm:%s237] %v282
                %v284 = vld [vmem:[%s244 + $0x124] sm:%s237]
                %285 = vst [vmem:[%s245 + $0x4c] sm:%s237] %v284
                %v286 = vld [vmem:[%s244 + $0x140] sm:%s237]
                %287 = vst [vmem:[%s245 + $0x50] sm:%s237] %v286
                %v288 = vld [vmem:[%s244 + $0x144] sm:%s237]
                %289 = vst [vmem:[%s245 + $0x54] sm:%s237] %v288
                %v290 = vld [vmem:[%s244 + $0x160] sm:%s237]
                %291 = vst [vmem:[%s245 + $0x58] sm:%s237] %v290
                %v292 = vld [vmem:[%s244 + $0x164] sm:%s237]
                %293 = vst [vmem:[%s245 + $0x5c] sm:%s237] %v292
                %v294 = vld [vmem:[%s244 + $0x180] sm:%s237]
                %295 = vst [vmem:[%s245 + $0x60] sm:%s237] %v294
                %v296 = vld [vmem:[%s244 + $0x184] sm:%s237]
                %297 = vst [vmem:[%s245 + $0x64] sm:%s237] %v296
              $region49: #{tpu_custom_call.1} parent=43 // loop_footer
                %s243 = sadd.s32 1, %s239
              $region50: #{tpu_custom_call.1} parent=43 // loop_footer_branch
                %238 = sbr.rel target = $region46
              $region51: #{tpu_custom_call.1} parent=43 // loop_exit
                _
            $region44: #{tpu_custom_call.1} parent=35 // pred_fallthru
              _
          $region36: #{tpu_custom_call.1} parent=31 // pred_fallthru
            _
          %370 = vnop
        $region32: #{tpu_custom_call.1} parent=27 // pred_fallthru
          _
      $region28: #{tpu_custom_call.1} parent=5 // pred_fallthru
        _
      %p371 = scmp.le.s32.totalorder 1, %s17
      %p372 = scmp.lt.s32.totalorder %s17, 5
      %p373 = pnand %p371, %p372
      %p374 = pneg %p373
      // Predicated region
      $region70: #{tpu_custom_call.1} parent=5 // pred_check
        _
      $region71: #{tpu_custom_call.1} parent=5 // pred_check_branch
        %376 = sbr.rel (%p373) target = $region73
      $region72: #{tpu_custom_call.1} parent=5 // pred_region
        %s377 = ssub.s32 %s17, 1
        // Predicated region
        $region74: #{tpu_custom_call.1} parent=72 // pred_check
          %p378 = pneg %p38
        $region75: #{tpu_custom_call.1} parent=72 // pred_check_branch
          %380 = sbr.rel (%p378) target = $region77
        $region76: #{tpu_custom_call.1} parent=72 // pred_region
          %381 = dma.done [#allocation4], 64
        $region77: #{tpu_custom_call.1} parent=72 // pred_fallthru
          _
        %s382 = sand.u32 %s51, 1
        %s383 = sand.u32 %s51, 1
        %s384 = smul.addr %s383, 104
        %s385 = scalar_lea.vmem [#allocation5], %s384
        // Predicated region
        $region78: #{tpu_custom_call.1} parent=72 // pred_check
          %p386 = pneg %p64
        $region79: #{tpu_custom_call.1} parent=72 // pred_check_branch
          %388 = sbr.rel (%p386) target = $region81
        $region80: #{tpu_custom_call.1} parent=72 // pred_region
          _
        $region81: #{tpu_custom_call.1} parent=72 // pred_fallthru
          _
        %389 = sfence
        %p390 = pneg %p38
        %p391 = pneg %p35
        %s392 = sand.u32 %s51, 1
        %s393 = sand.u32 %s51, 1
        %s394 = smul.addr %s393, 104
        %s395 = scalar_lea.vmem [#allocation5], %s394
        %p396 = pneg %p64
        %p397 = pneg %p61
        %p398 = pneg %p85
        %p399 = pneg %p82
        %p400 = pneg %p106
        %p401 = pneg %p103
        %p402 = pneg %p132
        %p403 = pneg %p129
        %s404 = sand.u32 %s119, 1
        %s405 = scalar_lea.sflag [#allocation3], %s404
        %s406 = sand.u32 %s119, 1
        %s407 = smul.addr %s406, 48
        %s408 = scalar_lea.vmem [#allocation6], %s407
        %p409 = pneg %p158
        %p410 = pneg %p155
        %s411 = sand.u32 %s145, 1
        %s412 = sand.u32 %s145, 1
        %s413 = smul.addr %s412, 48
        %s414 = scalar_lea.vmem [#allocation7], %s413
        %p415 = pneg %p184
        %p416 = pneg %p181
        %s417 = smul.u32 2, %s22
        %p418 = scmp.lt.s32.totalorder %s417, 7
        %s419 = scalar_select %p418, %s417, 7
        %s420 = smul.addr %s419, 8
        %s421 = scalar_lea.vmem %s6, %s420
        %s422 = smul.u32 2, %s22
        %s423 = smul.u32 2, %s22
        %s424 = smul.u32 2, %s22
        %s425 = smul.u32 2, %s22
        %p426 = scmp.lt.s32.totalorder %s425, 7
        %s427 = scalar_select %p426, %s425, 7
        %s428 = smul.addr %s427, 8
        %s429 = scalar_lea.vmem %s6, %s428
        %s430 = smul.u32 2, %s22
        %s431 = sld [smem:[#allocation2]]
        %v432 = vld [vmem:[%s385] sm:$0xf]
        %v433 = vld [vmem:[%s385 + $0x4] sm:$0xf]
        %v434 = vunpack.c.l.bf16 %v432
        %v435 = vunpack.c.l.bf16 %v433
        %v436 = vstv %s431
        %v437 = vmul.f32 %v436, %v434
        %v438 = vmul.f32 %v436, %v435
        %s439 = sld [smem:[#allocation2 + $0x1]]
        %s440 = scalar_lea.vmem %s385, 8 [#allocation5]
        %v441 = vld [vmem:[%s440] sm:$0xf]
        %v442 = vld [vmem:[%s440 + $0x4] sm:$0xf]
        %v443 = vunpack.c.l.bf16 %v441
        %v444 = vunpack.c.l.bf16 %v442
        %v445 = vstv %s439
        %v446 = vmul.f32 %v445, %v443
        %v447 = vmul.f32 %v445, %v444
        %v448 = vadd.f32 %v437, %v446
        %v449 = vadd.f32 %v438, %v447
        %s450 = sld [smem:[#allocation2 + $0x2]]
        %s451 = scalar_lea.vmem %s385, 16 [#allocation5]
        %v452 = vld [vmem:[%s451] sm:$0xf]
        %v453 = vld [vmem:[%s451 + $0x4] sm:$0xf]
        %v454 = vunpack.c.l.bf16 %v452
        %v455 = vunpack.c.l.bf16 %v453
        %v456 = vstv %s450
        %v457 = vmul.f32 %v456, %v454
        %v458 = vmul.f32 %v456, %v455
        %v459 = vadd.f32 %v448, %v457
        %v460 = vadd.f32 %v449, %v458
        %s461 = sld [smem:[#allocation2 + $0x3]]
        %s462 = scalar_lea.vmem %s385, 24 [#allocation5]
        %v463 = vld [vmem:[%s462] sm:$0xf]
        %v464 = vld [vmem:[%s462 + $0x4] sm:$0xf]
        %v465 = vunpack.c.l.bf16 %v463
        %v466 = vunpack.c.l.bf16 %v464
        %v467 = vstv %s461
        %v468 = vmul.f32 %v467, %v465
        %v469 = vmul.f32 %v467, %v466
        %v470 = vadd.f32 %v459, %v468
        %v471 = vadd.f32 %v460, %v469
        %s472 = sld [smem:[#allocation2 + $0x4]]
        %s473 = scalar_lea.vmem %s385, 32 [#allocation5]
        %v474 = vld [vmem:[%s473] sm:$0xf]
        %v475 = vld [vmem:[%s473 + $0x4] sm:$0xf]
        %v476 = vunpack.c.l.bf16 %v474
        %v477 = vunpack.c.l.bf16 %v475
        %v478 = vstv %s472
        %v479 = vmul.f32 %v478, %v476
        %v480 = vmul.f32 %v478, %v477
        %v481 = vadd.f32 %v470, %v479
        %v482 = vadd.f32 %v471, %v480
        %s483 = sld [smem:[#allocation2 + $0x5]]
        %s484 = scalar_lea.vmem %s385, 40 [#allocation5]
        %v485 = vld [vmem:[%s484] sm:$0xf]
        %v486 = vld [vmem:[%s484 + $0x4] sm:$0xf]
        %v487 = vunpack.c.l.bf16 %v485
        %v488 = vunpack.c.l.bf16 %v486
        %v489 = vstv %s483
        %v490 = vmul.f32 %v489, %v487
        %v491 = vmul.f32 %v489, %v488
        %v492 = vadd.f32 %v481, %v490
        %v493 = vadd.f32 %v482, %v491
        %s494 = sld [smem:[#allocation2 + $0x6]]
        %s495 = scalar_lea.vmem %s385, 48 [#allocation5]
        %v496 = vld [vmem:[%s495] sm:$0xf]
        %v497 = vld [vmem:[%s495 + $0x4] sm:$0xf]
        %v498 = vunpack.c.l.bf16 %v496
        %v499 = vunpack.c.l.bf16 %v497
        %v500 = vstv %s494
        %v501 = vmul.f32 %v500, %v498
        %v502 = vmul.f32 %v500, %v499
        %v503 = vadd.f32 %v492, %v501
        %v504 = vadd.f32 %v493, %v502
        %s505 = sld [smem:[#allocation2 + $0x7]]
        %s506 = scalar_lea.vmem %s385, 56 [#allocation5]
        %v507 = vld [vmem:[%s506] sm:$0xf]
        %v508 = vld [vmem:[%s506 + $0x4] sm:$0xf]
        %v509 = vunpack.c.l.bf16 %v507
        %v510 = vunpack.c.l.bf16 %v508
        %v511 = vstv %s505
        %v512 = vmul.f32 %v511, %v509
        %v513 = vmul.f32 %v511, %v510
        %v514 = vadd.f32 %v503, %v512
        %v515 = vadd.f32 %v504, %v513
        %s516 = sld [smem:[#allocation2 + $0x8]]
        %s517 = scalar_lea.vmem %s385, 64 [#allocation5]
        %v518 = vld [vmem:[%s517] sm:$0xf]
        %v519 = vld [vmem:[%s517 + $0x4] sm:$0xf]
        %v520 = vunpack.c.l.bf16 %v518
        %v521 = vunpack.c.l.bf16 %v519
        %v522 = vstv %s516
        %v523 = vmul.f32 %v522, %v520
        %v524 = vmul.f32 %v522, %v521
        %v525 = vadd.f32 %v514, %v523
        %v526 = vadd.f32 %v515, %v524
        %s527 = sld [smem:[#allocation2 + $0x9]]
        %s528 = scalar_lea.vmem %s385, 72 [#allocation5]
        %v529 = vld [vmem:[%s528] sm:$0xf]
        %v530 = vld [vmem:[%s528 + $0x4] sm:$0xf]
        %v531 = vunpack.c.l.bf16 %v529
        %v532 = vunpack.c.l.bf16 %v530
        %v533 = vstv %s527
        %v534 = vmul.f32 %v533, %v531
        %v535 = vmul.f32 %v533, %v532
        %v536 = vadd.f32 %v525, %v534
        %v537 = vadd.f32 %v526, %v535
        %s538 = sld [smem:[#allocation2 + $0xa]]
        %s539 = scalar_lea.vmem %s385, 80 [#allocation5]
        %v540 = vld [vmem:[%s539] sm:$0xf]
        %v541 = vld [vmem:[%s539 + $0x4] sm:$0xf]
        %v542 = vunpack.c.l.bf16 %v540
        %v543 = vunpack.c.l.bf16 %v541
        %v544 = vstv %s538
        %v545 = vmul.f32 %v544, %v542
        %v546 = vmul.f32 %v544, %v543
        %v547 = vadd.f32 %v536, %v545
        %v548 = vadd.f32 %v537, %v546
        %s549 = sld [smem:[#allocation2 + $0xb]]
        %s550 = scalar_lea.vmem %s385, 88 [#allocation5]
        %v551 = vld [vmem:[%s550] sm:$0xf]
        %v552 = vld [vmem:[%s550 + $0x4] sm:$0xf]
        %v553 = vunpack.c.l.bf16 %v551
        %v554 = vunpack.c.l.bf16 %v552
        %v555 = vstv %s549
        %v556 = vmul.f32 %v555, %v553
        %v557 = vmul.f32 %v555, %v554
        %v558 = vadd.f32 %v547, %v556
        %v559 = vadd.f32 %v548, %v557
        %s560 = sld [smem:[#allocation2 + $0xc]]
        %s561 = scalar_lea.vmem %s385, 96 [#allocation5]
        %v562 = vld [vmem:[%s561] sm:$0xf]
        %v563 = vld [vmem:[%s561 + $0x4] sm:$0xf]
        %v564 = vunpack.c.l.bf16 %v562
        %v565 = vunpack.c.l.bf16 %v563
        %v566 = vstv %s560
        %v567 = vmul.f32 %v566, %v564
        %v568 = vmul.f32 %v566, %v565
        %v569 = vadd.f32 %v558, %v567
        %v570 = vadd.f32 %v559, %v568
        %v571 = vld [vmem:[%s2] sm:$0xff]
        %v572 = vld [vmem:[%s2 + $0x8] sm:$0xff]
        %v573 = vld [vmem:[%s2 + $0x10] sm:$0xff]
        %v574 = vld [vmem:[%s2 + $0x18] sm:$0xff]
        %v575 = vld [vmem:[%s3] sm:$0x1]
        %v577 = vlaneseq
        %v578 = vshrl.u32 %v577, 7
        %v579 = vsub.s32 0, %v578
        %v580 = vrot.slane %v575, %v579
        %vm582 = vcmask 261120
        %v584 = vsel %vm582, %v569, 0
        %v587 = vsel %vm582, %v570, 0
        %589 = vmatprep.subr.mxu0 0.0
        %590 = vmatpush1.msra.mxu0 0.0
        %591 = vmatprep.subr.mxu0 0.0
        %592 = vmatpush1.msra.mxu0 0.0
        %593 = vmatprep.subr.mxu0 0.0
        %594 = vmatpush1.msra.mxu0 0.0
        %595 = vmatprep.subr.mxu0 0.0
        %596 = vmatpush1.msra.mxu0 0.0
        %597 = vmatprep.subr.mxu0 0.0
        %598 = vmatpush1.msra.mxu0 0.0
        %599 = vmatprep.subr.mxu0 0.0
        %600 = vmatpush1.msra.mxu0 0.0
        %601 = vmatprep.subr.mxu0 0.0
        %602 = vmatpush1.msra.mxu0 0.0
        %603 = vmatprep.subr.mxu0 0.0
        %604 = vmatpush1.msra.mxu0 0.0
        %605 = vmatprep.subr.mxu0 0.0
        %606 = vmatpush1.msra.mxu0 0.0
        %607 = vmatprep.subr.mxu0 0.0
        %608 = vmatpush1.msra.mxu0 0.0
        %609 = vmatprep.subr.mxu0 0.0
        %610 = vmatpush1.msra.mxu0 0.0
        %611 = vmatprep.subr.mxu0 0.0
        %612 = vmatpush1.msra.mxu0 0.0
        %613 = vmatprep.subr.mxu0 0.0
        %614 = vmatpush1.msra.mxu0 %v574
        %615 = vmatprep.subr.mxu0 0.0
        %616 = vmatpush1.msra.mxu0 %v573
        %617 = vmatprep.subr.mxu0 0.0
        %618 = vmatpush1.msra.mxu0 %v572
        %619 = vmatprep.subr.mxu0 0.0
        %620 = vmatpush1.msra.mxu0 %v571
        %621 = vmatprep.subr.mxu0 0.0
        %622 = vmatpush2.msra.mxu0 0.0
        %623 = vmatprep.subr.mxu0 0.0
        %624 = vmatpush2.msra.mxu0 0.0
        %625 = vmatprep.subr.mxu0 0.0
        %626 = vmatpush2.msra.mxu0 0.0
        %627 = vmatprep.subr.mxu0 0.0
        %628 = vmatpush2.msra.mxu0 0.0
        %629 = vmatprep.subr.mxu0 0.0
        %630 = vmatpush2.msra.mxu0 0.0
        %631 = vmatprep.subr.mxu0 0.0
        %632 = vmatpush2.msra.mxu0 0.0
        %633 = vmatprep.subr.mxu0 0.0
        %634 = vmatpush2.msra.mxu0 0.0
        %635 = vmatprep.subr.mxu0 0.0
        %636 = vmatpush2.msra.mxu0 0.0
        %637 = vmatprep.subr.mxu0 0.0
        %638 = vmatpush2.msra.mxu0 0.0
        %639 = vmatprep.subr.mxu0 0.0
        %640 = vmatpush2.msra.mxu0 0.0
        %641 = vmatprep.subr.mxu0 0.0
        %642 = vmatpush2.msra.mxu0 0.0
        %643 = vmatprep.subr.mxu0 0.0
        %644 = vmatpush2.msra.mxu0 0.0
        %645 = vmatprep.subr.mxu0 0.0
        %646 = vmatpush2.msra.mxu0 0.0
        %647 = vmatprep.subr.mxu0 0.0
        %648 = vmatpush2.msra.mxu0 0.0
        %649 = vmatprep.subr.mxu0 0.0
        %650 = vmatpush2.msra.mxu0 0.0
        %651 = vmatprep.subr.mxu0 0.0
        %652 = vmatpush2.msra.mxu0 0.0
        %653 = vmatprep.mubr.f32.mxu0 0.0
        %654 = vmatmul.mubr.f32.gmra.mxu0 %v584
        %v655 = vpop.f32.mrf.mxu0
        %v656 = vadd.f32 %v580, %v655
        %v657 = vpop.f32.mrf.mxu0
        %658 = vmatprep.mubr.f32.mxu0 0.0
        %659 = vmatmul.mubr.f32.gmra.mxu0 %v587
        %v660 = vpop.f32.mrf.mxu0
        %v661 = vadd.f32 %v580, %v660
        %v662 = vpop.f32.mrf.mxu0
        %663 = vdwg.mxu0
        %664 = vmax.xlane.f32.xlu0 %v656
        %v665 = vpop.xlane.xlu0 %664
        %666 = vmax.xlane.f32.xlu0 %v661
        %v667 = vpop.xlane.xlu0 %666
        %v668 = vsub.f32 %v656, %v665
        %v669 = vsub.f32 %v661, %v667
        %v670 = vmul.f32 %v668, 1.442695
        %v671 = vpow.pop %v670
        %v672 = vmul.f32 %v669, 1.442695
        %v673 = vpow.pop %v672
        %674 = vadd.xlane.f32.xlu0 %v671
        %v675 = vpop.xlane.xlu0 %674
        %676 = vadd.xlane.f32.xlu0 %v673
        %v677 = vpop.xlane.xlu0 %676
        %v678 = vlog2.pop %v675
        %v679 = vmul.f32 %v678, 0.6931472
        %v680 = vlog2.pop %v677
        %v681 = vmul.f32 %v680, 0.6931472
        %v682 = vsub.f32 %v668, %v679
        %v683 = vsub.f32 %v669, %v681
        %684 = vst [vmem:[%s408] sm:$0xff] %v682
        %685 = vst [vmem:[%s408 + $0x8] sm:$0xff] %v683
        %v686 = vadd.f32 %v665, %v679
        %v687 = vadd.f32 %v667, %v681
        %vm688 = vcmask 7168
        %689 = vst.msk [vmem:[%s414] sm:$0xff] %vm688, %v686
        %690 = vst.msk [vmem:[%s414 + $0x8] sm:$0xff] %vm688, %v687
        %s691 = sld [smem:[#allocation2 + $0x80]]
        %v692 = vld [vmem:[%s385] sm:$0xf]
        %v693 = vld [vmem:[%s385 + $0x4] sm:$0xf]
        %v694 = vunpack.c.l.bf16 %v692
        %v695 = vunpack.c.l.bf16 %v693
        %v696 = vstv %s691
        %v697 = vmul.f32 %v696, %v694
        %v698 = vmul.f32 %v696, %v695
        %s699 = sld [smem:[#allocation2 + $0x81]]
        %v700 = vld [vmem:[%s440] sm:$0xf]
        %v701 = vld [vmem:[%s440 + $0x4] sm:$0xf]
        %v702 = vunpack.c.l.bf16 %v700
        %v703 = vunpack.c.l.bf16 %v701
        %v704 = vstv %s699
        %v705 = vmul.f32 %v704, %v702
        %v706 = vmul.f32 %v704, %v703
        %v707 = vadd.f32 %v697, %v705
        %v708 = vadd.f32 %v698, %v706
        %s709 = sld [smem:[#allocation2 + $0x82]]
        %v710 = vld [vmem:[%s451] sm:$0xf]
        %v711 = vld [vmem:[%s451 + $0x4] sm:$0xf]
        %v712 = vunpack.c.l.bf16 %v710
        %v713 = vunpack.c.l.bf16 %v711
        %v714 = vstv %s709
        %v715 = vmul.f32 %v714, %v712
        %v716 = vmul.f32 %v714, %v713
        %v717 = vadd.f32 %v707, %v715
        %v718 = vadd.f32 %v708, %v716
        %s719 = sld [smem:[#allocation2 + $0x83]]
        %v720 = vld [vmem:[%s462] sm:$0xf]
        %v721 = vld [vmem:[%s462 + $0x4] sm:$0xf]
        %v722 = vunpack.c.l.bf16 %v720
        %v723 = vunpack.c.l.bf16 %v721
        %v724 = vstv %s719
        %v725 = vmul.f32 %v724, %v722
        %v726 = vmul.f32 %v724, %v723
        %v727 = vadd.f32 %v717, %v725
        %v728 = vadd.f32 %v718, %v726
        %s729 = sld [smem:[#allocation2 + $0x84]]
        %v730 = vld [vmem:[%s473] sm:$0xf]
        %v731 = vld [vmem:[%s473 + $0x4] sm:$0xf]
        %v732 = vunpack.c.l.bf16 %v730
        %v733 = vunpack.c.l.bf16 %v731
        %v734 = vstv %s729
        %v735 = vmul.f32 %v734, %v732
        %v736 = vmul.f32 %v734, %v733
        %v737 = vadd.f32 %v727, %v735
        %v738 = vadd.f32 %v728, %v736
        %s739 = sld [smem:[#allocation2 + $0x85]]
        %v740 = vld [vmem:[%s484] sm:$0xf]
        %v741 = vld [vmem:[%s484 + $0x4] sm:$0xf]
        %v742 = vunpack.c.l.bf16 %v740
        %v743 = vunpack.c.l.bf16 %v741
        %v744 = vstv %s739
        %v745 = vmul.f32 %v744, %v742
        %v746 = vmul.f32 %v744, %v743
        %v747 = vadd.f32 %v737, %v745
        %v748 = vadd.f32 %v738, %v746
        %s749 = sld [smem:[#allocation2 + $0x86]]
        %v750 = vld [vmem:[%s495] sm:$0xf]
        %v751 = vld [vmem:[%s495 + $0x4] sm:$0xf]
        %v752 = vunpack.c.l.bf16 %v750
        %v753 = vunpack.c.l.bf16 %v751
        %v754 = vstv %s749
        %v755 = vmul.f32 %v754, %v752
        %v756 = vmul.f32 %v754, %v753
        %v757 = vadd.f32 %v747, %v755
        %v758 = vadd.f32 %v748, %v756
        %s759 = sld [smem:[#allocation2 + $0x87]]
        %v760 = vld [vmem:[%s506] sm:$0xf]
        %v761 = vld [vmem:[%s506 + $0x4] sm:$0xf]
        %v762 = vunpack.c.l.bf16 %v760
        %v763 = vunpack.c.l.bf16 %v761
        %v764 = vstv %s759
        %v765 = vmul.f32 %v764, %v762
        %v766 = vmul.f32 %v764, %v763
        %v767 = vadd.f32 %v757, %v765
        %v768 = vadd.f32 %v758, %v766
        %s769 = sld [smem:[#allocation2 + $0x88]]
        %v770 = vld [vmem:[%s517] sm:$0xf]
        %v771 = vld [vmem:[%s517 + $0x4] sm:$0xf]
        %v772 = vunpack.c.l.bf16 %v770
        %v773 = vunpack.c.l.bf16 %v771
        %v774 = vstv %s769
        %v775 = vmul.f32 %v774, %v772
        %v776 = vmul.f32 %v774, %v773
        %v777 = vadd.f32 %v767, %v775
        %v778 = vadd.f32 %v768, %v776
        %s779 = sld [smem:[#allocation2 + $0x89]]
        %v780 = vld [vmem:[%s528] sm:$0xf]
        %v781 = vld [vmem:[%s528 + $0x4] sm:$0xf]
        %v782 = vunpack.c.l.bf16 %v780
        %v783 = vunpack.c.l.bf16 %v781
        %v784 = vstv %s779
        %v785 = vmul.f32 %v784, %v782
        %v786 = vmul.f32 %v784, %v783
        %v787 = vadd.f32 %v777, %v785
        %v788 = vadd.f32 %v778, %v786
        %s789 = sld [smem:[#allocation2 + $0x8a]]
        %v790 = vld [vmem:[%s539] sm:$0xf]
        %v791 = vld [vmem:[%s539 + $0x4] sm:$0xf]
        %v792 = vunpack.c.l.bf16 %v790
        %v793 = vunpack.c.l.bf16 %v791
        %v794 = vstv %s789
        %v795 = vmul.f32 %v794, %v792
        %v796 = vmul.f32 %v794, %v793
        %v797 = vadd.f32 %v787, %v795
        %v798 = vadd.f32 %v788, %v796
        %s799 = sld [smem:[#allocation2 + $0x8b]]
        %v800 = vld [vmem:[%s550] sm:$0xf]
        %v801 = vld [vmem:[%s550 + $0x4] sm:$0xf]
        %v802 = vunpack.c.l.bf16 %v800
        %v803 = vunpack.c.l.bf16 %v801
        %v804 = vstv %s799
        %v805 = vmul.f32 %v804, %v802
        %v806 = vmul.f32 %v804, %v803
        %v807 = vadd.f32 %v797, %v805
        %v808 = vadd.f32 %v798, %v806
        %s809 = sld [smem:[#allocation2 + $0x8c]]
        %v810 = vld [vmem:[%s561] sm:$0xf]
        %v811 = vld [vmem:[%s561 + $0x4] sm:$0xf]
        %v812 = vunpack.c.l.bf16 %v810
        %v813 = vunpack.c.l.bf16 %v811
        %v814 = vstv %s809
        %v815 = vmul.f32 %v814, %v812
        %v816 = vmul.f32 %v814, %v813
        %v817 = vadd.f32 %v807, %v815
        %v818 = vadd.f32 %v808, %v816
        %s819 = scalar_lea.vmem %s2, 32
        %v820 = vld [vmem:[%s819] sm:$0xff]
        %v821 = vld [vmem:[%s819 + $0x8] sm:$0xff]
        %v822 = vld [vmem:[%s819 + $0x10] sm:$0xff]
        %v823 = vld [vmem:[%s819 + $0x18] sm:$0xff]
        %s824 = scalar_lea.vmem %s3, 1
        %v825 = vld [vmem:[%s824] sm:$0x1]
        %v827 = vlaneseq
        %v828 = vshrl.u32 %v827, 7
        %v829 = vsub.s32 0, %v828
        %v830 = vrot.slane %v825, %v829
        %v833 = vsel %vm582, %v817, 0
        %v836 = vsel %vm582, %v818, 0
        %838 = vmatprep.subr.mxu0 0.0
        %839 = vmatpush1.msra.mxu0 0.0
        %840 = vmatprep.subr.mxu0 0.0
        %841 = vmatpush1.msra.mxu0 0.0
        %842 = vmatprep.subr.mxu0 0.0
        %843 = vmatpush1.msra.mxu0 0.0
        %844 = vmatprep.subr.mxu0 0.0
        %845 = vmatpush1.msra.mxu0 0.0
        %846 = vmatprep.subr.mxu0 0.0
        %847 = vmatpush1.msra.mxu0 0.0
        %848 = vmatprep.subr.mxu0 0.0
        %849 = vmatpush1.msra.mxu0 0.0
        %850 = vmatprep.subr.mxu0 0.0
        %851 = vmatpush1.msra.mxu0 0.0
        %852 = vmatprep.subr.mxu0 0.0
        %853 = vmatpush1.msra.mxu0 0.0
        %854 = vmatprep.subr.mxu0 0.0
        %855 = vmatpush1.msra.mxu0 0.0
        %856 = vmatprep.subr.mxu0 0.0
        %857 = vmatpush1.msra.mxu0 0.0
        %858 = vmatprep.subr.mxu0 0.0
        %859 = vmatpush1.msra.mxu0 0.0
        %860 = vmatprep.subr.mxu0 0.0
        %861 = vmatpush1.msra.mxu0 0.0
        %862 = vmatprep.subr.mxu0 0.0
        %863 = vmatpush1.msra.mxu0 %v823
        %864 = vmatprep.subr.mxu0 0.0
        %865 = vmatpush1.msra.mxu0 %v822
        %866 = vmatprep.subr.mxu0 0.0
        %867 = vmatpush1.msra.mxu0 %v821
        %868 = vmatprep.subr.mxu0 0.0
        %869 = vmatpush1.msra.mxu0 %v820
        %870 = vmatprep.subr.mxu0 0.0
        %871 = vmatpush2.msra.mxu0 0.0
        %872 = vmatprep.subr.mxu0 0.0
        %873 = vmatpush2.msra.mxu0 0.0
        %874 = vmatprep.subr.mxu0 0.0
        %875 = vmatpush2.msra.mxu0 0.0
        %876 = vmatprep.subr.mxu0 0.0
        %877 = vmatpush2.msra.mxu0 0.0
        %878 = vmatprep.subr.mxu0 0.0
        %879 = vmatpush2.msra.mxu0 0.0
        %880 = vmatprep.subr.mxu0 0.0
        %881 = vmatpush2.msra.mxu0 0.0
        %882 = vmatprep.subr.mxu0 0.0
        %883 = vmatpush2.msra.mxu0 0.0
        %884 = vmatprep.subr.mxu0 0.0
        %885 = vmatpush2.msra.mxu0 0.0
        %886 = vmatprep.subr.mxu0 0.0
        %887 = vmatpush2.msra.mxu0 0.0
        %888 = vmatprep.subr.mxu0 0.0
        %889 = vmatpush2.msra.mxu0 0.0
        %890 = vmatprep.subr.mxu0 0.0
        %891 = vmatpush2.msra.mxu0 0.0
        %892 = vmatprep.subr.mxu0 0.0
        %893 = vmatpush2.msra.mxu0 0.0
        %894 = vmatprep.subr.mxu0 0.0
        %895 = vmatpush2.msra.mxu0 0.0
        %896 = vmatprep.subr.mxu0 0.0
        %897 = vmatpush2.msra.mxu0 0.0
        %898 = vmatprep.subr.mxu0 0.0
        %899 = vmatpush2.msra.mxu0 0.0
        %900 = vmatprep.subr.mxu0 0.0
        %901 = vmatpush2.msra.mxu0 0.0
        %902 = vmatprep.mubr.f32.mxu0 0.0
        %903 = vmatmul.mubr.f32.gmra.mxu0 %v833
        %v904 = vpop.f32.mrf.mxu0
        %v905 = vadd.f32 %v830, %v904
        %v906 = vpop.f32.mrf.mxu0
        %907 = vmatprep.mubr.f32.mxu0 0.0
        %908 = vmatmul.mubr.f32.gmra.mxu0 %v836
        %v909 = vpop.f32.mrf.mxu0
        %v910 = vadd.f32 %v830, %v909
        %v911 = vpop.f32.mrf.mxu0
        %912 = vdwg.mxu0
        %913 = vmax.xlane.f32.xlu0 %v905
        %v914 = vpop.xlane.xlu0 %913
        %915 = vmax.xlane.f32.xlu0 %v910
        %v916 = vpop.xlane.xlu0 %915
        %v917 = vsub.f32 %v905, %v914
        %v918 = vsub.f32 %v910, %v916
        %v919 = vmul.f32 %v917, 1.442695
        %v920 = vpow.pop %v919
        %v921 = vmul.f32 %v918, 1.442695
        %v922 = vpow.pop %v921
        %923 = vadd.xlane.f32.xlu0 %v920
        %v924 = vpop.xlane.xlu0 %923
        %925 = vadd.xlane.f32.xlu0 %v922
        %v926 = vpop.xlane.xlu0 %925
        %v927 = vlog2.pop %v924
        %v928 = vmul.f32 %v927, 0.6931472
        %v929 = vlog2.pop %v926
        %v930 = vmul.f32 %v929, 0.6931472
        %v931 = vsub.f32 %v917, %v928
        %v932 = vsub.f32 %v918, %v930
        %s933 = scalar_lea.vmem %s408, 16 [#allocation6]
        %934 = vst [vmem:[%s933] sm:$0xff] %v931
        %935 = vst [vmem:[%s933 + $0x8] sm:$0xff] %v932
        %v936 = vadd.f32 %v914, %v928
        %v937 = vadd.f32 %v916, %v930
        %s938 = scalar_lea.vmem %s414, 16 [#allocation7]
        %939 = vst.msk [vmem:[%s938] sm:$0xff] %vm688, %v936
        %940 = vst.msk [vmem:[%s938 + $0x8] sm:$0xff] %vm688, %v937
        %s941 = sld [smem:[#allocation2 + $0x100]]
        %v942 = vld [vmem:[%s385] sm:$0xf]
        %v943 = vld [vmem:[%s385 + $0x4] sm:$0xf]
        %v944 = vunpack.c.l.bf16 %v942
        %v945 = vunpack.c.l.bf16 %v943
        %v946 = vstv %s941
        %v947 = vmul.f32 %v946, %v944
        %v948 = vmul.f32 %v946, %v945
        %s949 = sld [smem:[#allocation2 + $0x101]]
        %v950 = vld [vmem:[%s440] sm:$0xf]
        %v951 = vld [vmem:[%s440 + $0x4] sm:$0xf]
        %v952 = vunpack.c.l.bf16 %v950
        %v953 = vunpack.c.l.bf16 %v951
        %v954 = vstv %s949
        %v955 = vmul.f32 %v954, %v952
        %v956 = vmul.f32 %v954, %v953
        %v957 = vadd.f32 %v947, %v955
        %v958 = vadd.f32 %v948, %v956
        %s959 = sld [smem:[#allocation2 + $0x102]]
        %v960 = vld [vmem:[%s451] sm:$0xf]
        %v961 = vld [vmem:[%s451 + $0x4] sm:$0xf]
        %v962 = vunpack.c.l.bf16 %v960
        %v963 = vunpack.c.l.bf16 %v961
        %v964 = vstv %s959
        %v965 = vmul.f32 %v964, %v962
        %v966 = vmul.f32 %v964, %v963
        %v967 = vadd.f32 %v957, %v965
        %v968 = vadd.f32 %v958, %v966
        %s969 = sld [smem:[#allocation2 + $0x103]]
        %v970 = vld [vmem:[%s462] sm:$0xf]
        %v971 = vld [vmem:[%s462 + $0x4] sm:$0xf]
        %v972 = vunpack.c.l.bf16 %v970
        %v973 = vunpack.c.l.bf16 %v971
        %v974 = vstv %s969
        %v975 = vmul.f32 %v974, %v972
        %v976 = vmul.f32 %v974, %v973
        %v977 = vadd.f32 %v967, %v975
        %v978 = vadd.f32 %v968, %v976
        %s979 = sld [smem:[#allocation2 + $0x104]]
        %v980 = vld [vmem:[%s473] sm:$0xf]
        %v981 = vld [vmem:[%s473 + $0x4] sm:$0xf]
        %v982 = vunpack.c.l.bf16 %v980
        %v983 = vunpack.c.l.bf16 %v981
        %v984 = vstv %s979
        %v985 = vmul.f32 %v984, %v982
        %v986 = vmul.f32 %v984, %v983
        %v987 = vadd.f32 %v977, %v985
        %v988 = vadd.f32 %v978, %v986
        %s989 = sld [smem:[#allocation2 + $0x105]]
        %v990 = vld [vmem:[%s484] sm:$0xf]
        %v991 = vld [vmem:[%s484 + $0x4] sm:$0xf]
        %v992 = vunpack.c.l.bf16 %v990
        %v993 = vunpack.c.l.bf16 %v991
        %v994 = vstv %s989
        %v995 = vmul.f32 %v994, %v992
        %v996 = vmul.f32 %v994, %v993
        %v997 = vadd.f32 %v987, %v995
        %v998 = vadd.f32 %v988, %v996
        %s999 = sld [smem:[#allocation2 + $0x106]]
        %v1000 = vld [vmem:[%s495] sm:$0xf]
        %v1001 = vld [vmem:[%s495 + $0x4] sm:$0xf]
        %v1002 = vunpack.c.l.bf16 %v1000
        %v1003 = vunpack.c.l.bf16 %v1001
        %v1004 = vstv %s999
        %v1005 = vmul.f32 %v1004, %v1002
        %v1006 = vmul.f32 %v1004, %v1003
        %v1007 = vadd.f32 %v997, %v1005
        %v1008 = vadd.f32 %v998, %v1006
        %s1009 = sld [smem:[#allocation2 + $0x107]]
        %v1010 = vld [vmem:[%s506] sm:$0xf]
        %v1011 = vld [vmem:[%s506 + $0x4] sm:$0xf]
        %v1012 = vunpack.c.l.bf16 %v1010
        %v1013 = vunpack.c.l.bf16 %v1011
        %v1014 = vstv %s1009
        %v1015 = vmul.f32 %v1014, %v1012
        %v1016 = vmul.f32 %v1014, %v1013
        %v1017 = vadd.f32 %v1007, %v1015
        %v1018 = vadd.f32 %v1008, %v1016
        %s1019 = sld [smem:[#allocation2 + $0x108]]
        %v1020 = vld [vmem:[%s517] sm:$0xf]
        %v1021 = vld [vmem:[%s517 + $0x4] sm:$0xf]
        %v1022 = vunpack.c.l.bf16 %v1020
        %v1023 = vunpack.c.l.bf16 %v1021
        %v1024 = vstv %s1019
        %v1025 = vmul.f32 %v1024, %v1022
        %v1026 = vmul.f32 %v1024, %v1023
        %v1027 = vadd.f32 %v1017, %v1025
        %v1028 = vadd.f32 %v1018, %v1026
        %s1029 = sld [smem:[#allocation2 + $0x109]]
        %v1030 = vld [vmem:[%s528] sm:$0xf]
        %v1031 = vld [vmem:[%s528 + $0x4] sm:$0xf]
        %v1032 = vunpack.c.l.bf16 %v1030
        %v1033 = vunpack.c.l.bf16 %v1031
        %v1034 = vstv %s1029
        %v1035 = vmul.f32 %v1034, %v1032
        %v1036 = vmul.f32 %v1034, %v1033
        %v1037 = vadd.f32 %v1027, %v1035
        %v1038 = vadd.f32 %v1028, %v1036
        %s1039 = sld [smem:[#allocation2 + $0x10a]]
        %v1040 = vld [vmem:[%s539] sm:$0xf]
        %v1041 = vld [vmem:[%s539 + $0x4] sm:$0xf]
        %v1042 = vunpack.c.l.bf16 %v1040
        %v1043 = vunpack.c.l.bf16 %v1041
        %v1044 = vstv %s1039
        %v1045 = vmul.f32 %v1044, %v1042
        %v1046 = vmul.f32 %v1044, %v1043
        %v1047 = vadd.f32 %v1037, %v1045
        %v1048 = vadd.f32 %v1038, %v1046
        %s1049 = sld [smem:[#allocation2 + $0x10b]]
        %v1050 = vld [vmem:[%s550] sm:$0xf]
        %v1051 = vld [vmem:[%s550 + $0x4] sm:$0xf]
        %v1052 = vunpack.c.l.bf16 %v1050
        %v1053 = vunpack.c.l.bf16 %v1051
        %v1054 = vstv %s1049
        %v1055 = vmul.f32 %v1054, %v1052
        %v1056 = vmul.f32 %v1054, %v1053
        %v1057 = vadd.f32 %v1047, %v1055
        %v1058 = vadd.f32 %v1048, %v1056
        %s1059 = sld [smem:[#allocation2 + $0x10c]]
        %v1060 = vld [vmem:[%s561] sm:$0xf]
        %v1061 = vld [vmem:[%s561 + $0x4] sm:$0xf]
        %v1062 = vunpack.c.l.bf16 %v1060
        %v1063 = vunpack.c.l.bf16 %v1061
        %v1064 = vstv %s1059
        %v1065 = vmul.f32 %v1064, %v1062
        %v1066 = vmul.f32 %v1064, %v1063
        %v1067 = vadd.f32 %v1057, %v1065
        %v1068 = vadd.f32 %v1058, %v1066
        %s1069 = scalar_lea.vmem %s2, 64
        %v1070 = vld [vmem:[%s1069] sm:$0xff]
        %v1071 = vld [vmem:[%s1069 + $0x8] sm:$0xff]
        %v1072 = vld [vmem:[%s1069 + $0x10] sm:$0xff]
        %v1073 = vld [vmem:[%s1069 + $0x18] sm:$0xff]
        %s1074 = scalar_lea.vmem %s3, 2
        %v1075 = vld [vmem:[%s1074] sm:$0x1]
        %v1077 = vlaneseq
        %v1078 = vshrl.u32 %v1077, 7
        %v1079 = vsub.s32 0, %v1078
        %v1080 = vrot.slane %v1075, %v1079
        %v1083 = vsel %vm582, %v1067, 0
        %v1086 = vsel %vm582, %v1068, 0
        %1088 = vmatprep.subr.mxu0 0.0
        %1089 = vmatpush1.msra.mxu0 0.0
        %1090 = vmatprep.subr.mxu0 0.0
        %1091 = vmatpush1.msra.mxu0 0.0
        %1092 = vmatprep.subr.mxu0 0.0
        %1093 = vmatpush1.msra.mxu0 0.0
        %1094 = vmatprep.subr.mxu0 0.0
        %1095 = vmatpush1.msra.mxu0 0.0
        %1096 = vmatprep.subr.mxu0 0.0
        %1097 = vmatpush1.msra.mxu0 0.0
        %1098 = vmatprep.subr.mxu0 0.0
        %1099 = vmatpush1.msra.mxu0 0.0
        %1100 = vmatprep.subr.mxu0 0.0
        %1101 = vmatpush1.msra.mxu0 0.0
        %1102 = vmatprep.subr.mxu0 0.0
        %1103 = vmatpush1.msra.mxu0 0.0
        %1104 = vmatprep.subr.mxu0 0.0
        %1105 = vmatpush1.msra.mxu0 0.0
        %1106 = vmatprep.subr.mxu0 0.0
        %1107 = vmatpush1.msra.mxu0 0.0
        %1108 = vmatprep.subr.mxu0 0.0
        %1109 = vmatpush1.msra.mxu0 0.0
        %1110 = vmatprep.subr.mxu0 0.0
        %1111 = vmatpush1.msra.mxu0 0.0
        %1112 = vmatprep.subr.mxu0 0.0
        %1113 = vmatpush1.msra.mxu0 %v1073
        %1114 = vmatprep.subr.mxu0 0.0
        %1115 = vmatpush1.msra.mxu0 %v1072
        %1116 = vmatprep.subr.mxu0 0.0
        %1117 = vmatpush1.msra.mxu0 %v1071
        %1118 = vmatprep.subr.mxu0 0.0
        %1119 = vmatpush1.msra.mxu0 %v1070
        %1120 = vmatprep.subr.mxu0 0.0
        %1121 = vmatpush2.msra.mxu0 0.0
        %1122 = vmatprep.subr.mxu0 0.0
        %1123 = vmatpush2.msra.mxu0 0.0
        %1124 = vmatprep.subr.mxu0 0.0
        %1125 = vmatpush2.msra.mxu0 0.0
        %1126 = vmatprep.subr.mxu0 0.0
        %1127 = vmatpush2.msra.mxu0 0.0
        %1128 = vmatprep.subr.mxu0 0.0
        %1129 = vmatpush2.msra.mxu0 0.0
        %1130 = vmatprep.subr.mxu0 0.0
        %1131 = vmatpush2.msra.mxu0 0.0
        %1132 = vmatprep.subr.mxu0 0.0
        %1133 = vmatpush2.msra.mxu0 0.0
        %1134 = vmatprep.subr.mxu0 0.0
        %1135 = vmatpush2.msra.mxu0 0.0
        %1136 = vmatprep.subr.mxu0 0.0
        %1137 = vmatpush2.msra.mxu0 0.0
        %1138 = vmatprep.subr.mxu0 0.0
        %1139 = vmatpush2.msra.mxu0 0.0
        %1140 = vmatprep.subr.mxu0 0.0
        %1141 = vmatpush2.msra.mxu0 0.0
        %1142 = vmatprep.subr.mxu0 0.0
        %1143 = vmatpush2.msra.mxu0 0.0
        %1144 = vmatprep.subr.mxu0 0.0
        %1145 = vmatpush2.msra.mxu0 0.0
        %1146 = vmatprep.subr.mxu0 0.0
        %1147 = vmatpush2.msra.mxu0 0.0
        %1148 = vmatprep.subr.mxu0 0.0
        %1149 = vmatpush2.msra.mxu0 0.0
        %1150 = vmatprep.subr.mxu0 0.0
        %1151 = vmatpush2.msra.mxu0 0.0
        %1152 = vmatprep.mubr.f32.mxu0 0.0
        %1153 = vmatmul.mubr.f32.gmra.mxu0 %v1083
        %v1154 = vpop.f32.mrf.mxu0
        %v1155 = vadd.f32 %v1080, %v1154
        %v1156 = vpop.f32.mrf.mxu0
        %1157 = vmatprep.mubr.f32.mxu0 0.0
        %1158 = vmatmul.mubr.f32.gmra.mxu0 %v1086
        %v1159 = vpop.f32.mrf.mxu0
        %v1160 = vadd.f32 %v1080, %v1159
        %v1161 = vpop.f32.mrf.mxu0
        %1162 = vdwg.mxu0
        %1163 = vmax.xlane.f32.xlu0 %v1155
        %v1164 = vpop.xlane.xlu0 %1163
        %1165 = vmax.xlane.f32.xlu0 %v1160
        %v1166 = vpop.xlane.xlu0 %1165
        %v1167 = vsub.f32 %v1155, %v1164
        %v1168 = vsub.f32 %v1160, %v1166
        %v1169 = vmul.f32 %v1167, 1.442695
        %v1170 = vpow.pop %v1169
        %v1171 = vmul.f32 %v1168, 1.442695
        %v1172 = vpow.pop %v1171
        %1173 = vadd.xlane.f32.xlu0 %v1170
        %v1174 = vpop.xlane.xlu0 %1173
        %1175 = vadd.xlane.f32.xlu0 %v1172
        %v1176 = vpop.xlane.xlu0 %1175
        %v1177 = vlog2.pop %v1174
        %v1178 = vmul.f32 %v1177, 0.6931472
        %v1179 = vlog2.pop %v1176
        %v1180 = vmul.f32 %v1179, 0.6931472
        %v1181 = vsub.f32 %v1167, %v1178
        %v1182 = vsub.f32 %v1168, %v1180
        %s1183 = scalar_lea.vmem %s408, 32 [#allocation6]
        %1184 = vst [vmem:[%s1183] sm:$0xff] %v1181
        %1185 = vst [vmem:[%s1183 + $0x8] sm:$0xff] %v1182
        %v1186 = vadd.f32 %v1164, %v1178
        %v1187 = vadd.f32 %v1166, %v1180
        %s1188 = scalar_lea.vmem %s414, 32 [#allocation7]
        %1189 = vst.msk [vmem:[%s1188] sm:$0xff] %vm688, %v1186
        %1190 = vst.msk [vmem:[%s1188 + $0x8] sm:$0xff] %vm688, %v1187
        %s1191 = sld [smem:[#allocation2 + $0x180]]
        %v1192 = vld [vmem:[%s385] sm:$0xf]
        %v1193 = vld [vmem:[%s385 + $0x4] sm:$0xf]
        %v1194 = vunpack.c.l.bf16 %v1192
        %v1195 = vunpack.c.l.bf16 %v1193
        %v1196 = vstv %s1191
        %v1197 = vmul.f32 %v1196, %v1194
        %v1198 = vmul.f32 %v1196, %v1195
        %s1199 = sld [smem:[#allocation2 + $0x181]]
        %v1200 = vld [vmem:[%s440] sm:$0xf]
        %v1201 = vld [vmem:[%s440 + $0x4] sm:$0xf]
        %v1202 = vunpack.c.l.bf16 %v1200
        %v1203 = vunpack.c.l.bf16 %v1201
        %v1204 = vstv %s1199
        %v1205 = vmul.f32 %v1204, %v1202
        %v1206 = vmul.f32 %v1204, %v1203
        %v1207 = vadd.f32 %v1197, %v1205
        %v1208 = vadd.f32 %v1198, %v1206
        %s1209 = sld [smem:[#allocation2 + $0x182]]
        %v1210 = vld [vmem:[%s451] sm:$0xf]
        %v1211 = vld [vmem:[%s451 + $0x4] sm:$0xf]
        %v1212 = vunpack.c.l.bf16 %v1210
        %v1213 = vunpack.c.l.bf16 %v1211
        %v1214 = vstv %s1209
        %v1215 = vmul.f32 %v1214, %v1212
        %v1216 = vmul.f32 %v1214, %v1213
        %v1217 = vadd.f32 %v1207, %v1215
        %v1218 = vadd.f32 %v1208, %v1216
        %s1219 = sld [smem:[#allocation2 + $0x183]]
        %v1220 = vld [vmem:[%s462] sm:$0xf]
        %v1221 = vld [vmem:[%s462 + $0x4] sm:$0xf]
        %v1222 = vunpack.c.l.bf16 %v1220
        %v1223 = vunpack.c.l.bf16 %v1221
        %v1224 = vstv %s1219
        %v1225 = vmul.f32 %v1224, %v1222
        %v1226 = vmul.f32 %v1224, %v1223
        %v1227 = vadd.f32 %v1217, %v1225
        %v1228 = vadd.f32 %v1218, %v1226
        %s1229 = sld [smem:[#allocation2 + $0x184]]
        %v1230 = vld [vmem:[%s473] sm:$0xf]
        %v1231 = vld [vmem:[%s473 + $0x4] sm:$0xf]
        %v1232 = vunpack.c.l.bf16 %v1230
        %v1233 = vunpack.c.l.bf16 %v1231
        %v1234 = vstv %s1229
        %v1235 = vmul.f32 %v1234, %v1232
        %v1236 = vmul.f32 %v1234, %v1233
        %v1237 = vadd.f32 %v1227, %v1235
        %v1238 = vadd.f32 %v1228, %v1236
        %s1239 = sld [smem:[#allocation2 + $0x185]]
        %v1240 = vld [vmem:[%s484] sm:$0xf]
        %v1241 = vld [vmem:[%s484 + $0x4] sm:$0xf]
        %v1242 = vunpack.c.l.bf16 %v1240
        %v1243 = vunpack.c.l.bf16 %v1241
        %v1244 = vstv %s1239
        %v1245 = vmul.f32 %v1244, %v1242
        %v1246 = vmul.f32 %v1244, %v1243
        %v1247 = vadd.f32 %v1237, %v1245
        %v1248 = vadd.f32 %v1238, %v1246
        %s1249 = sld [smem:[#allocation2 + $0x186]]
        %v1250 = vld [vmem:[%s495] sm:$0xf]
        %v1251 = vld [vmem:[%s495 + $0x4] sm:$0xf]
        %v1252 = vunpack.c.l.bf16 %v1250
        %v1253 = vunpack.c.l.bf16 %v1251
        %v1254 = vstv %s1249
        %v1255 = vmul.f32 %v1254, %v1252
        %v1256 = vmul.f32 %v1254, %v1253
        %v1257 = vadd.f32 %v1247, %v1255
        %v1258 = vadd.f32 %v1248, %v1256
        %s1259 = sld [smem:[#allocation2 + $0x187]]
        %v1260 = vld [vmem:[%s506] sm:$0xf]
        %v1261 = vld [vmem:[%s506 + $0x4] sm:$0xf]
        %v1262 = vunpack.c.l.bf16 %v1260
        %v1263 = vunpack.c.l.bf16 %v1261
        %v1264 = vstv %s1259
        %v1265 = vmul.f32 %v1264, %v1262
        %v1266 = vmul.f32 %v1264, %v1263
        %v1267 = vadd.f32 %v1257, %v1265
        %v1268 = vadd.f32 %v1258, %v1266
        %s1269 = sld [smem:[#allocation2 + $0x188]]
        %v1270 = vld [vmem:[%s517] sm:$0xf]
        %v1271 = vld [vmem:[%s517 + $0x4] sm:$0xf]
        %v1272 = vunpack.c.l.bf16 %v1270
        %v1273 = vunpack.c.l.bf16 %v1271
        %v1274 = vstv %s1269
        %v1275 = vmul.f32 %v1274, %v1272
        %v1276 = vmul.f32 %v1274, %v1273
        %v1277 = vadd.f32 %v1267, %v1275
        %v1278 = vadd.f32 %v1268, %v1276
        %s1279 = sld [smem:[#allocation2 + $0x189]]
        %v1280 = vld [vmem:[%s528] sm:$0xf]
        %v1281 = vld [vmem:[%s528 + $0x4] sm:$0xf]
        %v1282 = vunpack.c.l.bf16 %v1280
        %v1283 = vunpack.c.l.bf16 %v1281
        %v1284 = vstv %s1279
        %v1285 = vmul.f32 %v1284, %v1282
        %v1286 = vmul.f32 %v1284, %v1283
        %v1287 = vadd.f32 %v1277, %v1285
        %v1288 = vadd.f32 %v1278, %v1286
        %s1289 = sld [smem:[#allocation2 + $0x18a]]
        %v1290 = vld [vmem:[%s539] sm:$0xf]
        %v1291 = vld [vmem:[%s539 + $0x4] sm:$0xf]
        %v1292 = vunpack.c.l.bf16 %v1290
        %v1293 = vunpack.c.l.bf16 %v1291
        %v1294 = vstv %s1289
        %v1295 = vmul.f32 %v1294, %v1292
        %v1296 = vmul.f32 %v1294, %v1293
        %v1297 = vadd.f32 %v1287, %v1295
        %v1298 = vadd.f32 %v1288, %v1296
        %s1299 = sld [smem:[#allocation2 + $0x18b]]
        %v1300 = vld [vmem:[%s550] sm:$0xf]
        %v1301 = vld [vmem:[%s550 + $0x4] sm:$0xf]
        %v1302 = vunpack.c.l.bf16 %v1300
        %v1303 = vunpack.c.l.bf16 %v1301
        %v1304 = vstv %s1299
        %v1305 = vmul.f32 %v1304, %v1302
        %v1306 = vmul.f32 %v1304, %v1303
        %v1307 = vadd.f32 %v1297, %v1305
        %v1308 = vadd.f32 %v1298, %v1306
        %s1309 = sld [smem:[#allocation2 + $0x18c]]
        %v1310 = vld [vmem:[%s561] sm:$0xf]
        %v1311 = vld [vmem:[%s561 + $0x4] sm:$0xf]
        %v1312 = vunpack.c.l.bf16 %v1310
        %v1313 = vunpack.c.l.bf16 %v1311
        %v1314 = vstv %s1309
        %v1315 = vmul.f32 %v1314, %v1312
        %v1316 = vmul.f32 %v1314, %v1313
        %v1317 = vadd.f32 %v1307, %v1315
        %v1318 = vadd.f32 %v1308, %v1316
        %1319 = vst.msk [vmem:[%s429] sm:$0xff] %vm582, %v1317
        %1320 = vst.msk [vmem:[%s429 + $0x8] sm:$0xff] %vm582, %v1318
        %s1321 = sand.u32 %s119, 1
        %s1322 = scalar_lea.sflag [#allocation3], %s1321
        %s1323 = sand.u32 %s119, 1
        %s1324 = smul.addr %s1323, 48
        %s1325 = scalar_lea.vmem [#allocation6], %s1324
        %s1326 = sand.u32 %s145, 1
        %s1327 = sand.u32 %s145, 1
        %s1328 = smul.addr %s1327, 48
        %s1329 = scalar_lea.vmem [#allocation7], %s1328
        %s1330 = smul.u32 2, %s22
        %p1331 = scmp.lt.s32.totalorder %s1330, 7
        %s1332 = scalar_select %p1331, %s1330, 7
        %s1333 = smul.addr %s1332, 8
        %s1334 = scalar_lea.vmem %s6, %s1333
        // Predicated region
        $region82: #{tpu_custom_call.1} parent=72 // pred_check
          %p1335 = pneg %p129
        $region83: #{tpu_custom_call.1} parent=72 // pred_check_branch
          %1337 = sbr.rel (%p1335) target = $region85
        $region84: #{tpu_custom_call.1} parent=72 // pred_region
          #allocation9 [shape = 'u32[6]{0}', space=smem, size = 0x18, scoped, tag = 'DMA stride descriptor']
          %s1338 = smul.u32 2, %s22
          %s1340 = ssub.s32 768, 768
          %1341 = vsyncadd %s1322, %s1340
          %s1342 = smul.addr %s1338, 128
          %s1343 = scalar_lea.hbm %s4, %s1342
          %s1345 = sshll.u32 1, 14
          %s1346 = sxor.u32 4294967295, %s1345
          %s1349 = sshll.u32 7, 18
          %s1350 = sxor.u32 4294967295, %s1349
          %s1351 = sand.u32 0, %s1350
          %s1353 = sor.u32 %s1351, 0
          %s1354 = sshll.u32 %s1325, 4
          %s1355 = int_to_ptr.vmem [resolvable:$true] %s1354
          %1361 = sst [smem:[#allocation9]] 256
          %s1362 = scalar_lea.smem [#allocation9], 1
          %1363 = sst [smem:[%s1362]] 1024
          %s1364 = scalar_lea.smem [#allocation9], 2
          %1365 = sst [smem:[%s1364]] 2
          %s1366 = scalar_lea.smem [#allocation9], 3
          %1367 = sst [smem:[%s1366]] 128
          %s1368 = scalar_lea.smem [#allocation9], 4
          %1369 = sst [smem:[%s1368]] 128
          %s1370 = scalar_lea.smem [#allocation9], 5
          %1371 = sst [smem:[%s1370]] 8
          %1373 = dma.general %s1355, 768, %s1343, %s1322, 131072, [#allocation9], %s1353, 0
        $region85: #{tpu_custom_call.1} parent=72 // pred_fallthru
          _
        // Predicated region
        $region86: #{tpu_custom_call.1} parent=72 // pred_check
          %p1374 = pneg %p155
        $region87: #{tpu_custom_call.1} parent=72 // pred_check_branch
          %1376 = sbr.rel (%p1374) target = $region89
        $region88: #{tpu_custom_call.1} parent=72 // pred_region
          %s1377 = smul.u32 2, %s22
          %s1378 = smul.addr %s1377, 8
          %s1379 = scalar_lea.vmem %s5, %s1378
          // Predicated region
          $region90: #{tpu_custom_call.1} parent=88 // pred_check
            _
          $region91: #{tpu_custom_call.1} parent=88 // pred_check_branch
            %1381 = sbr.rel (0) target = $region93
          $region92: #{tpu_custom_call.1} parent=88 // pred_region
            // Predicated region
            $region94: #{tpu_custom_call.1} parent=92 // pred_check
              _
            $region95: #{tpu_custom_call.1} parent=92 // pred_check_branch
              %1383 = sbr.rel (0) target = $region97
            $region96: #{tpu_custom_call.1} parent=92 // pred_region
              // Predicated region
              $region109: #{tpu_custom_call.1} parent=96 // pred_check
                _
              $region110: #{tpu_custom_call.1} parent=96 // pred_check_branch
                %1409 = sbr.rel (0) target = $region112
              $region111: #{tpu_custom_call.1} parent=96 // pred_region
                loop: start=0, step=1, limit=1
                $region113: #{tpu_custom_call.1} parent=111 // loop_pre_header
                  _
                $region114: #{tpu_custom_call.1} parent=111 // loop_header
                  %s1411 = sphi 0, %s1415
                  %p1412 = scmp.ge.s32.totalorder %s1411, 1
                  %s1416 = sphi %s1329, %s1329
                  %s1417 = sphi %s1379, %s1379
                $region115: #{tpu_custom_call.1} parent=111 // loop_header_branch
                  %1414 = sbr.rel (%p1412) target = $region119
                $region116: #{tpu_custom_call.1} parent=111 // loop_body
                  %v1418 = vld [vmem:[%s1416] sm:$0xff]
                  %1419 = vst [vmem:[%s1417] sm:$0xff] %v1418
                  %v1420 = vld [vmem:[%s1416 + $0x8] sm:$0xff]
                  %1421 = vst [vmem:[%s1417 + $0x8] sm:$0xff] %v1420
                  %v1422 = vld [vmem:[%s1416 + $0x10] sm:$0xff]
                  %1423 = vst [vmem:[%s1417 + $0x40] sm:$0xff] %v1422
                  %v1424 = vld [vmem:[%s1416 + $0x18] sm:$0xff]
                  %1425 = vst [vmem:[%s1417 + $0x48] sm:$0xff] %v1424
                  %v1426 = vld [vmem:[%s1416 + $0x20] sm:$0xff]
                  %1427 = vst [vmem:[%s1417 + $0x80] sm:$0xff] %v1426
                  %v1428 = vld [vmem:[%s1416 + $0x28] sm:$0xff]
                  %1429 = vst [vmem:[%s1417 + $0x88] sm:$0xff] %v1428
                $region117: #{tpu_custom_call.1} parent=111 // loop_footer
                  %s1415 = sadd.s32 1, %s1411
                $region118: #{tpu_custom_call.1} parent=111 // loop_footer_branch
                  %1410 = sbr.rel target = $region114
                $region119: #{tpu_custom_call.1} parent=111 // loop_exit
                  _
              $region112: #{tpu_custom_call.1} parent=96 // pred_fallthru
                _
              // Predicated region
              $region120: #{tpu_custom_call.1} parent=96 // pred_check
                _
              $region121: #{tpu_custom_call.1} parent=96 // pred_check_branch
                %1431 = sbr.rel target = $region123
              $region122: #{tpu_custom_call.1} parent=96 // pred_region
                _
              $region123: #{tpu_custom_call.1} parent=96 // pred_fallthru
                _
            $region97: #{tpu_custom_call.1} parent=92 // pred_fallthru
              _
            // Predicated region
            $region98: #{tpu_custom_call.1} parent=92 // pred_check
              _
            $region99: #{tpu_custom_call.1} parent=92 // pred_check_branch
              %1385 = sbr.rel target = $region101
            $region100: #{tpu_custom_call.1} parent=92 // pred_region
              %s1387 = ssub.s32 256, 1
              loop: start=0, step=1, limit=1
              $region102: #{tpu_custom_call.1} parent=100 // loop_pre_header
                _
              $region103: #{tpu_custom_call.1} parent=100 // loop_header
                %s1389 = sphi 0, %s1393
                %p1390 = scmp.ge.s32.totalorder %s1389, 1
                %s1394 = sphi %s1329, %s1329
                %s1395 = sphi %s1379, %s1379
              $region104: #{tpu_custom_call.1} parent=100 // loop_header_branch
                %1392 = sbr.rel (%p1390) target = $region108
              $region105: #{tpu_custom_call.1} parent=100 // loop_body
                %v1396 = vld [vmem:[%s1394] sm:%s1387]
                %1397 = vst [vmem:[%s1395] sm:%s1387] %v1396
                %v1398 = vld [vmem:[%s1394 + $0x8] sm:%s1387]
                %1399 = vst [vmem:[%s1395 + $0x8] sm:%s1387] %v1398
                %v1400 = vld [vmem:[%s1394 + $0x10] sm:%s1387]
                %1401 = vst [vmem:[%s1395 + $0x40] sm:%s1387] %v1400
                %v1402 = vld [vmem:[%s1394 + $0x18] sm:%s1387]
                %1403 = vst [vmem:[%s1395 + $0x48] sm:%s1387] %v1402
                %v1404 = vld [vmem:[%s1394 + $0x20] sm:%s1387]
                %1405 = vst [vmem:[%s1395 + $0x80] sm:%s1387] %v1404
                %v1406 = vld [vmem:[%s1394 + $0x28] sm:%s1387]
                %1407 = vst [vmem:[%s1395 + $0x88] sm:%s1387] %v1406
              $region106: #{tpu_custom_call.1} parent=100 // loop_footer
                %s1393 = sadd.s32 1, %s1389
              $region107: #{tpu_custom_call.1} parent=100 // loop_footer_branch
                %1388 = sbr.rel target = $region103
              $region108: #{tpu_custom_call.1} parent=100 // loop_exit
                _
            $region101: #{tpu_custom_call.1} parent=92 // pred_fallthru
              _
          $region93: #{tpu_custom_call.1} parent=88 // pred_fallthru
            _
          %1432 = vnop
        $region89: #{tpu_custom_call.1} parent=72 // pred_fallthru
          _
        // Predicated region
        $region124: #{tpu_custom_call.1} parent=72 // pred_check
          %p1433 = pneg %p181
        $region125: #{tpu_custom_call.1} parent=72 // pred_check_branch
          %1435 = sbr.rel (%p1433) target = $region127
        $region126: #{tpu_custom_call.1} parent=72 // pred_region
          %s1436 = smul.u32 2, %s22
        $region127: #{tpu_custom_call.1} parent=72 // pred_fallthru
          _
      $region73: #{tpu_custom_call.1} parent=5 // pred_fallthru
        _
      %p1437 = scmp.le.s32.totalorder 2, %s17
      // Predicated region
      $region128: #{tpu_custom_call.1} parent=5 // pred_check
        %p1438 = pneg %p1437
      $region129: #{tpu_custom_call.1} parent=5 // pred_check_branch
        %1440 = sbr.rel (%p1438) target = $region131
      $region130: #{tpu_custom_call.1} parent=5 // pred_region
        %s1441 = ssub.s32 %s17, 2
        // Predicated region
        $region132: #{tpu_custom_call.1} parent=130 // pred_check
          %p1442 = pneg %p135
        $region133: #{tpu_custom_call.1} parent=130 // pred_check_branch
          %1444 = sbr.rel (%p1442) target = $region135
        $region134: #{tpu_custom_call.1} parent=130 // pred_region
          %s1445 = sand.u32 %s120, 1
          %s1446 = scalar_lea.sflag [#allocation3], %s1445
          %s1447 = sand.u32 %s120, 1
          %s1448 = smul.addr %s1447, 48
          %s1449 = scalar_lea.vmem [#allocation6], %s1448
          %1450 = dma.done %s1446, 768
        $region135: #{tpu_custom_call.1} parent=130 // pred_fallthru
          _
        // Predicated region
        $region136: #{tpu_custom_call.1} parent=130 // pred_check
          %p1451 = pneg %p161
        $region137: #{tpu_custom_call.1} parent=130 // pred_check_branch
          %1453 = sbr.rel (%p1451) target = $region139
        $region138: #{tpu_custom_call.1} parent=130 // pred_region
          %s1454 = sand.u32 %s146, 1
          %s1455 = sand.u32 %s146, 1
          %s1456 = smul.addr %s1455, 48
          %s1457 = scalar_lea.vmem [#allocation7], %s1456
        $region139: #{tpu_custom_call.1} parent=130 // pred_fallthru
          _
        // Predicated region
        $region140: #{tpu_custom_call.1} parent=130 // pred_check
          %p1458 = pneg %p187
        $region141: #{tpu_custom_call.1} parent=130 // pred_check_branch
          %1460 = sbr.rel (%p1458) target = $region143
        $region142: #{tpu_custom_call.1} parent=130 // pred_region
          %s1461 = smul.u32 2, %s23
          %p1462 = scmp.lt.s32.totalorder %s1461, 7
          %s1463 = scalar_select %p1462, %s1461, 7
          %s1464 = smul.addr %s1463, 8
          %s1465 = scalar_lea.vmem %s6, %s1464
        $region143: #{tpu_custom_call.1} parent=130 // pred_fallthru
          _
      $region131: #{tpu_custom_call.1} parent=5 // pred_fallthru
        _
    $region6: #{tpu_custom_call.1} parent=1 // loop_footer
      %s21 = sadd.s32 1, %s17
    $region7: #{tpu_custom_call.1} parent=1 // loop_footer_branch
      %16 = sbr.rel target = $region3
    $region8: #{tpu_custom_call.1} parent=1 // loop_exit
      _
    %1466 = vsyncpa [#allocation3], 1
    %s1467 = scalar_lea.sflag [#allocation3], 1
    %1468 = vsyncpa %s1467, 1
    %1469 = vsyncpa [#allocation4], 1
    %s1470 = scalar_lea.sflag [#allocation4], 1
    %1471 = vsyncpa %s1470, 1

</llo_original>
